<compile_context>
chip_gen: v6e
topology: v6e:2x2x1
jax: 0.10.0
libtpu: 0.0.40
codegen_flags: <defaults>
</compile_context>

<pallas_src>
import jax
import jax.numpy as jnp
from jax.experimental import pallas as pl
from jax.experimental.pallas import tpu as pltpu

# ---- toy problem configuration (mirrors ImprovedModel's structure at small scale) ----
BATCH = 2
SEQ = 8
HIDDEN = 32            # attention hidden_dim (128*n in the real model)
NUM_HEADS = 4          # 8*n in the real model
HEAD_DIM = HIDDEN // NUM_HEADS
FC1_DIM = HIDDEN // 2  # fc1: 128*n -> 64*n
OUT_DIM = 8            # fc2 output_size


def mha_attention_head_kernel(x_ref, w_ref, b_ref, w2_ref, b2_ref, o_ref):
    """Faithful attention path (softmax over the QUERY axis = torch Softmax(dim=2)),
    fused with fc_out@fc1, ReLU, fc2.  Mean over queries is folded into attn."""
    B, S, H = x_ref.shape
    nh, hd = NUM_HEADS, HEAD_DIM

    w = w_ref[...]                    # (H, 4H) = [Wq*scale | Wk | Wv | pad(Wo@Wfc1)], 128 lanes
    b = b_ref[...]                    # (1, 4H) = [0 | bk | bv | pad(bo@Wfc1 + bfc1)]

    # Single full-slab, lane-filling projection: (B*S, H) @ (H, 4H).  The last H output
    # columns (the fused fc_out@fc1 weights) are computed here but never read from qkv --
    # the MXU pushes 128 lanes per pass anyway, so they are free and no weight slice is needed.
    x2d = x_ref[...].reshape(B * S, H)
    qkv = jnp.dot(x2d, w, preferred_element_type=jnp.float32) + b
    qkv = qkv.reshape(B, S, 4 * H)

    head_ctx = []
    for h in range(nh):                                   # static 4-way unroll (heads)
        # NOTE: per-head lane slices retained: Mosaic dot_general only takes a single
        # leading batch dim, so an all-heads (B*nh)-batched einsum would need an extra
        # sublane<->lane relayout that costs as much as the slices at this size.
        q_h = qkv[:, :, h * hd:(h + 1) * hd]              # (B, S, hd)  scale already in Wq
        k_h = qkv[:, :, H + h * hd:H + (h + 1) * hd]      # (B, S, hd)
        v_h = qkv[:, :, 2 * H + h * hd:2 * H + (h + 1) * hd]

        energy = jnp.einsum('bqd,bkd->bqk', q_h, k_h,
                            preferred_element_type=jnp.float32)          # (B, Sq, Sk)

        # softmax over the QUERY axis (axis=1) == torch Softmax(dim=2) on (B, nh, Sq, Sk)
        m = jnp.max(energy, axis=1, keepdims=True)
        e = jnp.exp(energy - m)
        inv = pl.reciprocal(jnp.sum(e, axis=1, keepdims=True), approx=True)   # EUP slot
        attn = e * inv

        # Fold the query-mean into attn: shrinks the context matmul to (1,Sk)@(Sk,hd)
        # and removes the later per-head mean reduction (algebraically identical).
        attn_mean = jnp.mean(attn, axis=1, keepdims=True)                 # (B, 1, Sk)
        head_ctx.append(jnp.einsum('bqk,bkd->bqd', attn_mean, v_h,
                                   preferred_element_type=jnp.float32))   # (B, 1, hd)

    out_mean = jnp.concatenate(head_ctx, axis=2).reshape(B, H)            # (B, H)

    # fc_out and fc1 are fused (linear o linear); the padded columns (FC1..H-1) are zero.
    h1 = jnp.dot(out_mean, w[:, 3 * H:], preferred_element_type=jnp.float32) + b[:, 3 * H:]
    h1 = jnp.maximum(h1, 0.0)                                             # ReLU
    # w2 is zero-row-padded to (H, OUT) host-side so no lane slice of h1 is needed.
    o_ref[...] = jnp.dot(h1, w2_ref[...], preferred_element_type=jnp.float32) + b2_ref[...]


def fast_head_kernel(x_ref, w_pre_ref, b_pre_ref, w2_ref, b2_ref, o_ref):
    """Algebraic fast path: query-axis softmax + mean over queries => the attention block
    equals (mean_S x) @ Wv + bv, so everything up to the ReLU collapses into ONE matmul
    against the host-fused W_pre = Wv @ Wo @ Wfc1."""
    x_mean = jnp.mean(x_ref[...], axis=1)                                 # (B, H) sublane reduce
    h1 = jnp.dot(x_mean, w_pre_ref[...], preferred_element_type=jnp.float32) + b_pre_ref[...]
    h1 = jnp.maximum(h1, 0.0)
    o_ref[...] = jnp.dot(h1, w2_ref[...], preferred_element_type=jnp.float32) + b2_ref[...]


def _fuse_params(params):
    (wq, bq, wk, bk, wv, bv, wo, bo, w1, b1, w2, b2) = params
    H = wq.shape[0]
    fc1 = w1.shape[1]
    hd = H // NUM_HEADS
    scale = jnp.float32(1.0 / (hd ** 0.5))
    hp = jax.lax.Precision.HIGHEST                        # host-side fusions at full precision

    # fc_out o fc1 fused (no nonlinearity between them in ImprovedModel.forward)
    w_of1 = jnp.dot(wo, w1, precision=hp)                 # (H, FC1)
    b_of1 = jnp.dot(bo, w1, precision=hp) + b1            # (1, FC1)
    pad_w = jnp.zeros((H, H - fc1), jnp.float32)
    pad_b = jnp.zeros((1, H - fc1), jnp.float32)

    # attention-path slabs: scale folded into Wq, bq dropped (cancels under query-axis softmax)
    w_slab = jnp.concatenate([wq * scale, wk, wv,
                              jnp.concatenate([w_of1, pad_w], axis=1)], axis=1)   # (H, 4H)
    b_slab = jnp.concatenate([jnp.zeros_like(bq), bk, bv,
                              jnp.concatenate([b_of1, pad_b], axis=1)], axis=1)   # (1, 4H)
    w2_pad = jnp.concatenate([w2, jnp.zeros((H - fc1, w2.shape[1]), jnp.float32)], axis=0)

    # fast-path pre-ReLU fusion: mean_S(x) @ (Wv@Wo@Wfc1) + ((bv@Wo+bo)@Wfc1 + bfc1)
    w_pre = jnp.dot(jnp.dot(wv, wo, precision=hp), w1, precision=hp)      # (H, FC1)
    b_pre = jnp.dot(jnp.dot(bv, wo, precision=hp) + bo, w1, precision=hp) + b1

    return dict(w_slab=w_slab, b_slab=b_slab, w2_pad=w2_pad,
                w_pre=w_pre, b_pre=b_pre, w2=w2, b2=b2)


def attention_fc_head(x, params, use_fast_path=True):
    """x: (B, S, H) float32 -> (B, OUT) float32.
    Matches attention -> fc1 -> ReLU -> fc2 of ImprovedModel (dropout = identity at eval)."""
    B, S, H = x.shape
    f = _fuse_params(params)
    if use_fast_path:
        kernel = fast_head_kernel
        operands = (x, f['w_pre'], f['b_pre'], f['w2'], f['b2'])
    else:
        kernel = mha_attention_head_kernel
        operands = (x, f['w_slab'], f['b_slab'], f['w2_pad'], f['b2'])
    out_dim = f['b2'].shape[1]
    # Gridless single-shot kernel: everything (~20 KB) fits trivially in VMEM; at this size
    # pallas_call fixed overhead dominates, so the fewest invocations wins.  See scaling
    # notes at the top for the batched / multi-TensorCore variant.
    return pl.pallas_call(
        kernel,
        out_shape=jax.ShapeDtypeStruct((B, out_dim), jnp.float32),
        in_specs=[pl.BlockSpec(memory_space=pltpu.MemorySpace.VMEM)] * len(operands),
        out_specs=pl.BlockSpec(memory_space=pltpu.MemorySpace.VMEM),
    )(*operands)


def init_params(key, hidden, fc1, out):
    keys = jax.random.split(key, 12)
    scale = 0.1

    def lin(kw, kb, din, dout):
        # stored as (in, out) so kernels compute x @ W + b (== torch x @ W_t.T + b)
        w = scale * jax.random.normal(kw, (din, dout), jnp.float32)
        b = scale * jax.random.normal(kb, (1, dout), jnp.float32)
        return w, b

    wq, bq = lin(keys[0], keys[1], hidden, hidden)
    wk, bk = lin(keys[2], keys[3], hidden, hidden)
    wv, bv = lin(keys[4], keys[5], hidden, hidden)
    wo, bo = lin(keys[6], keys[7], hidden, hidden)
    w1, b1 = lin(keys[8], keys[9], hidden, fc1)
    w2, b2 = lin(keys[10], keys[11], fc1, out)
    return (wq, bq, wk, bk, wv, bv, wo, bo, w1, b1, w2, b2)


def reference(x, params):
    """Pure-JAX reference mirroring the PyTorch forward exactly
    (MultiHeadAttention with Softmax(dim=2), mean(dim=1), then fc1 -> ReLU -> fc2)."""
    (wq, bq, wk, bk, wv, bv, wo, bo, w1, b1, w2, b2) = params
    B, S, H = x.shape
    nh, hd = NUM_HEADS, HEAD_DIM

    def proj(w, b):
        return (x @ w + b).reshape(B, S, nh, hd).transpose(0, 2, 1, 3)    # (B, nh, S, hd)

    Q, K, V = proj(wq, bq), proj(wk, bk), proj(wv, bv)
    energy = jnp.einsum('bhqd,bhkd->bhqk', Q, K) / (hd ** 0.5)
    attn = jax.nn.softmax(energy, axis=2)                 # torch dim=2 (query axis)
    out = jnp.einsum('bhqk,bhkd->bhqd', attn, V)
    out = out.transpose(0, 2, 1, 3).reshape(B, S, H)
    out = (out @ wo + bo).mean(axis=1)                    # fc_out, then mean over seq
    h1 = jnp.maximum(out @ w1 + b1, 0.0)                  # fc1 + ReLU
    return h1 @ w2 + b2                                   # fc2


if __name__ == "__main__":
    key = jax.random.PRNGKey(0)
    kx, kp = jax.random.split(key)
    x = jax.random.normal(kx, (BATCH, SEQ, HIDDEN), jnp.float32)
    params = init_params(kp, HIDDEN, FC1_DIM, OUT_DIM)

    ref = reference(x, params)

    out_attn = jax.block_until_ready(attention_fc_head(x, params, use_fast_path=False))
    out_fast = jax.block_until_ready(attention_fc_head(x, params, use_fast_path=True))

    assert out_attn.shape == (BATCH, OUT_DIM)
    assert out_fast.shape == (BATCH, OUT_DIM)
    err_attn = jnp.max(jnp.abs(out_attn - ref))
    err_fast = jnp.max(jnp.abs(out_fast - ref))
    # Fast path: exact-math host-side fusion; only f32 reassociation error.
    assert jnp.allclose(out_fast, ref, atol=1e-4, rtol=1e-4), f"fast-path mismatch: {err_fast}"
    # Attention path: pl.reciprocal(approx=True) (EUP rcp) bounds agreement to ~1e-4.
    assert jnp.allclose(out_attn, ref, atol=2e-3, rtol=2e-3), f"attention-path mismatch: {err_attn}"

    print("KERNEL_OK")
</pallas_src>

<mosaic_0001>
module attributes {stable_mosaic.version = 11 : i64} {
  func.func @mha_attention_head_kernel(%arg0: memref<2x8x32xf32, #tpu.memory_space<vmem>>, %arg1: memref<32x128xf32, #tpu.memory_space<vmem>>, %arg2: memref<1x128xf32, #tpu.memory_space<vmem>>, %arg3: memref<32x8xf32, #tpu.memory_space<vmem>>, %arg4: memref<1x8xf32, #tpu.memory_space<vmem>>, %arg5: memref<2x8xf32, #tpu.memory_space<vmem>>) attributes {dimension_semantics = [], scalar_prefetch = 0 : i64, scratch_operands = 0 : i64, tpu.core_type = #tpu.core_type<tc>} {
    %c0 = arith.constant 0 : index
    %c0_0 = arith.constant 0 : index
    %0 = vector.load %arg1[%c0, %c0_0] : memref<32x128xf32, #tpu.memory_space<vmem>>, vector<32x128xf32>
    %c0_1 = arith.constant 0 : index
    %c0_2 = arith.constant 0 : index
    %1 = vector.load %arg2[%c0_1, %c0_2] : memref<1x128xf32, #tpu.memory_space<vmem>>, vector<1x128xf32>
    %c0_3 = arith.constant 0 : index
    %c0_4 = arith.constant 0 : index
    %c0_5 = arith.constant 0 : index
    %2 = vector.load %arg0[%c0_3, %c0_4, %c0_5] : memref<2x8x32xf32, #tpu.memory_space<vmem>>, vector<2x8x32xf32>
    %3 = vector.shape_cast %2 : vector<2x8x32xf32> to vector<16x32xf32>
    %cst = arith.constant dense<0.000000e+00> : vector<16x128xf32>
    %4 = tpu.matmul %3, %0, %cst {dimension_numbers = #tpu.dot_dimension_numbers<[1], [0], [0], [1], [0, 0, 1, 1], [], []>} : vector<16x32xf32>, vector<32x128xf32>, vector<16x128xf32> -> vector<16x128xf32>
    %5 = vector.broadcast %1 : vector<1x128xf32> to vector<16x128xf32>
    %6 = arith.addf %4, %5 : vector<16x128xf32>
    %7 = vector.shape_cast %6 : vector<16x128xf32> to vector<2x8x128xf32>
    %8 = vector.extract_strided_slice %7 {offsets = [0, 0, 0], sizes = [2, 8, 8], strides = [1, 1, 1]} : vector<2x8x128xf32> to vector<2x8x8xf32>
    %9 = vector.extract_strided_slice %7 {offsets = [0, 0, 32], sizes = [2, 8, 8], strides = [1, 1, 1]} : vector<2x8x128xf32> to vector<2x8x8xf32>
    %10 = vector.extract_strided_slice %7 {offsets = [0, 0, 64], sizes = [2, 8, 8], strides = [1, 1, 1]} : vector<2x8x128xf32> to vector<2x8x8xf32>
    "tpu.trace_start"() <{level = 10 : i32, message = "bqd,bkd->bqk"}> : () -> ()
    %cst_6 = arith.constant dense<0.000000e+00> : vector<2x8x8xf32>
    %11 = tpu.matmul %8, %9, %cst_6 {dimension_numbers = #tpu.dot_dimension_numbers<[2], [2], [1], [1], [0, 0, 0, 1, 1, 1], [0], [0]>} : vector<2x8x8xf32>, vector<2x8x8xf32>, vector<2x8x8xf32> -> vector<2x8x8xf32>
    "tpu.trace_stop"() : () -> ()
    %cst_7 = arith.constant dense<0xFF800000> : vector<2x8xf32>
    %12 = vector.multi_reduction <maximumf>, %11, %cst_7 [1] : vector<2x8x8xf32> to vector<2x8xf32>
    %13 = vector.shape_cast %12 : vector<2x8xf32> to vector<2x1x8xf32>
    %14 = vector.broadcast %13 : vector<2x1x8xf32> to vector<2x8x8xf32>
    %15 = arith.subf %11, %14 : vector<2x8x8xf32>
    %16 = math.exp %15 : vector<2x8x8xf32>
    %cst_8 = arith.constant dense<0.000000e+00> : vector<2x8xf32>
    %17 = vector.multi_reduction <add>, %16, %cst_8 [1] : vector<2x8x8xf32> to vector<2x8xf32>
    %18 = vector.shape_cast %17 : vector<2x8xf32> to vector<2x1x8xf32>
    %19 = tpu.reciprocal %18 {approx = true} : vector<2x1x8xf32> -> vector<2x1x8xf32>
    %20 = vector.broadcast %19 : vector<2x1x8xf32> to vector<2x8x8xf32>
    %21 = arith.mulf %16, %20 : vector<2x8x8xf32>
    %cst_9 = arith.constant dense<0.000000e+00> : vector<2x8xf32>
    %22 = vector.multi_reduction <add>, %21, %cst_9 [1] : vector<2x8x8xf32> to vector<2x8xf32>
    %23 = vector.shape_cast %22 : vector<2x8xf32> to vector<2x1x8xf32>
    %cst_10 = arith.constant 8.000000e+00 : f32
    %24 = vector.broadcast %cst_10 : f32 to vector<2x1x8xf32>
    %25 = arith.divf %23, %24 : vector<2x1x8xf32>
    "tpu.trace_start"() <{level = 10 : i32, message = "bqk,bkd->bqd"}> : () -> ()
    %cst_11 = arith.constant dense<0.000000e+00> : vector<2x1x8xf32>
    %26 = tpu.matmul %25, %10, %cst_11 {dimension_numbers = #tpu.dot_dimension_numbers<[2], [1], [1], [2], [0, 0, 0, 1, 1, 2], [0], [0]>} : vector<2x1x8xf32>, vector<2x8x8xf32>, vector<2x1x8xf32> -> vector<2x1x8xf32>
    "tpu.trace_stop"() : () -> ()
    %27 = vector.extract_strided_slice %7 {offsets = [0, 0, 8], sizes = [2, 8, 8], strides = [1, 1, 1]} : vector<2x8x128xf32> to vector<2x8x8xf32>
    %28 = vector.extract_strided_slice %7 {offsets = [0, 0, 40], sizes = [2, 8, 8], strides = [1, 1, 1]} : vector<2x8x128xf32> to vector<2x8x8xf32>
    %29 = vector.extract_strided_slice %7 {offsets = [0, 0, 72], sizes = [2, 8, 8], strides = [1, 1, 1]} : vector<2x8x128xf32> to vector<2x8x8xf32>
    "tpu.trace_start"() <{level = 10 : i32, message = "bqd,bkd->bqk"}> : () -> ()
    %cst_12 = arith.constant dense<0.000000e+00> : vector<2x8x8xf32>
    %30 = tpu.matmul %27, %28, %cst_12 {dimension_numbers = #tpu.dot_dimension_numbers<[2], [2], [1], [1], [0, 0, 0, 1, 1, 1], [0], [0]>} : vector<2x8x8xf32>, vector<2x8x8xf32>, vector<2x8x8xf32> -> vector<2x8x8xf32>
    "tpu.trace_stop"() : () -> ()
    %cst_13 = arith.constant dense<0xFF800000> : vector<2x8xf32>
    %31 = vector.multi_reduction <maximumf>, %30, %cst_13 [1] : vector<2x8x8xf32> to vector<2x8xf32>
    %32 = vector.shape_cast %31 : vector<2x8xf32> to vector<2x1x8xf32>
    %33 = vector.broadcast %32 : vector<2x1x8xf32> to vector<2x8x8xf32>
    %34 = arith.subf %30, %33 : vector<2x8x8xf32>
    %35 = math.exp %34 : vector<2x8x8xf32>
    %cst_14 = arith.constant dense<0.000000e+00> : vector<2x8xf32>
    %36 = vector.multi_reduction <add>, %35, %cst_14 [1] : vector<2x8x8xf32> to vector<2x8xf32>
    %37 = vector.shape_cast %36 : vector<2x8xf32> to vector<2x1x8xf32>
    %38 = tpu.reciprocal %37 {approx = true} : vector<2x1x8xf32> -> vector<2x1x8xf32>
    %39 = vector.broadcast %38 : vector<2x1x8xf32> to vector<2x8x8xf32>
    %40 = arith.mulf %35, %39 : vector<2x8x8xf32>
    %cst_15 = arith.constant dense<0.000000e+00> : vector<2x8xf32>
    %41 = vector.multi_reduction <add>, %40, %cst_15 [1] : vector<2x8x8xf32> to vector<2x8xf32>
    %42 = vector.shape_cast %41 : vector<2x8xf32> to vector<2x1x8xf32>
    %cst_16 = arith.constant 8.000000e+00 : f32
    %43 = vector.broadcast %cst_16 : f32 to vector<2x1x8xf32>
    %44 = arith.divf %42, %43 : vector<2x1x8xf32>
    "tpu.trace_start"() <{level = 10 : i32, message = "bqk,bkd->bqd"}> : () -> ()
    %cst_17 = arith.constant dense<0.000000e+00> : vector<2x1x8xf32>
    %45 = tpu.matmul %44, %29, %cst_17 {dimension_numbers = #tpu.dot_dimension_numbers<[2], [1], [1], [2], [0, 0, 0, 1, 1, 2], [0], [0]>} : vector<2x1x8xf32>, vector<2x8x8xf32>, vector<2x1x8xf32> -> vector<2x1x8xf32>
    "tpu.trace_stop"() : () -> ()
    %46 = vector.extract_strided_slice %7 {offsets = [0, 0, 16], sizes = [2, 8, 8], strides = [1, 1, 1]} : vector<2x8x128xf32> to vector<2x8x8xf32>
    %47 = vector.extract_strided_slice %7 {offsets = [0, 0, 48], sizes = [2, 8, 8], strides = [1, 1, 1]} : vector<2x8x128xf32> to vector<2x8x8xf32>
    %48 = vector.extract_strided_slice %7 {offsets = [0, 0, 80], sizes = [2, 8, 8], strides = [1, 1, 1]} : vector<2x8x128xf32> to vector<2x8x8xf32>
    "tpu.trace_start"() <{level = 10 : i32, message = "bqd,bkd->bqk"}> : () -> ()
    %cst_18 = arith.constant dense<0.000000e+00> : vector<2x8x8xf32>
    %49 = tpu.matmul %46, %47, %cst_18 {dimension_numbers = #tpu.dot_dimension_numbers<[2], [2], [1], [1], [0, 0, 0, 1, 1, 1], [0], [0]>} : vector<2x8x8xf32>, vector<2x8x8xf32>, vector<2x8x8xf32> -> vector<2x8x8xf32>
    "tpu.trace_stop"() : () -> ()
    %cst_19 = arith.constant dense<0xFF800000> : vector<2x8xf32>
    %50 = vector.multi_reduction <maximumf>, %49, %cst_19 [1] : vector<2x8x8xf32> to vector<2x8xf32>
    %51 = vector.shape_cast %50 : vector<2x8xf32> to vector<2x1x8xf32>
    %52 = vector.broadcast %51 : vector<2x1x8xf32> to vector<2x8x8xf32>
    %53 = arith.subf %49, %52 : vector<2x8x8xf32>
    %54 = math.exp %53 : vector<2x8x8xf32>
    %cst_20 = arith.constant dense<0.000000e+00> : vector<2x8xf32>
    %55 = vector.multi_reduction <add>, %54, %cst_20 [1] : vector<2x8x8xf32> to vector<2x8xf32>
    %56 = vector.shape_cast %55 : vector<2x8xf32> to vector<2x1x8xf32>
    %57 = tpu.reciprocal %56 {approx = true} : vector<2x1x8xf32> -> vector<2x1x8xf32>
    %58 = vector.broadcast %57 : vector<2x1x8xf32> to vector<2x8x8xf32>
    %59 = arith.mulf %54, %58 : vector<2x8x8xf32>
    %cst_21 = arith.constant dense<0.000000e+00> : vector<2x8xf32>
    %60 = vector.multi_reduction <add>, %59, %cst_21 [1] : vector<2x8x8xf32> to vector<2x8xf32>
    %61 = vector.shape_cast %60 : vector<2x8xf32> to vector<2x1x8xf32>
    %cst_22 = arith.constant 8.000000e+00 : f32
    %62 = vector.broadcast %cst_22 : f32 to vector<2x1x8xf32>
    %63 = arith.divf %61, %62 : vector<2x1x8xf32>
    "tpu.trace_start"() <{level = 10 : i32, message = "bqk,bkd->bqd"}> : () -> ()
    %cst_23 = arith.constant dense<0.000000e+00> : vector<2x1x8xf32>
    %64 = tpu.matmul %63, %48, %cst_23 {dimension_numbers = #tpu.dot_dimension_numbers<[2], [1], [1], [2], [0, 0, 0, 1, 1, 2], [0], [0]>} : vector<2x1x8xf32>, vector<2x8x8xf32>, vector<2x1x8xf32> -> vector<2x1x8xf32>
    "tpu.trace_stop"() : () -> ()
    %65 = vector.extract_strided_slice %7 {offsets = [0, 0, 24], sizes = [2, 8, 8], strides = [1, 1, 1]} : vector<2x8x128xf32> to vector<2x8x8xf32>
    %66 = vector.extract_strided_slice %7 {offsets = [0, 0, 56], sizes = [2, 8, 8], strides = [1, 1, 1]} : vector<2x8x128xf32> to vector<2x8x8xf32>
    %67 = vector.extract_strided_slice %7 {offsets = [0, 0, 88], sizes = [2, 8, 8], strides = [1, 1, 1]} : vector<2x8x128xf32> to vector<2x8x8xf32>
    "tpu.trace_start"() <{level = 10 : i32, message = "bqd,bkd->bqk"}> : () -> ()
    %cst_24 = arith.constant dense<0.000000e+00> : vector<2x8x8xf32>
    %68 = tpu.matmul %65, %66, %cst_24 {dimension_numbers = #tpu.dot_dimension_numbers<[2], [2], [1], [1], [0, 0, 0, 1, 1, 1], [0], [0]>} : vector<2x8x8xf32>, vector<2x8x8xf32>, vector<2x8x8xf32> -> vector<2x8x8xf32>
    "tpu.trace_stop"() : () -> ()
    %cst_25 = arith.constant dense<0xFF800000> : vector<2x8xf32>
    %69 = vector.multi_reduction <maximumf>, %68, %cst_25 [1] : vector<2x8x8xf32> to vector<2x8xf32>
    %70 = vector.shape_cast %69 : vector<2x8xf32> to vector<2x1x8xf32>
    %71 = vector.broadcast %70 : vector<2x1x8xf32> to vector<2x8x8xf32>
    %72 = arith.subf %68, %71 : vector<2x8x8xf32>
    %73 = math.exp %72 : vector<2x8x8xf32>
    %cst_26 = arith.constant dense<0.000000e+00> : vector<2x8xf32>
    %74 = vector.multi_reduction <add>, %73, %cst_26 [1] : vector<2x8x8xf32> to vector<2x8xf32>
    %75 = vector.shape_cast %74 : vector<2x8xf32> to vector<2x1x8xf32>
    %76 = tpu.reciprocal %75 {approx = true} : vector<2x1x8xf32> -> vector<2x1x8xf32>
    %77 = vector.broadcast %76 : vector<2x1x8xf32> to vector<2x8x8xf32>
    %78 = arith.mulf %73, %77 : vector<2x8x8xf32>
    %cst_27 = arith.constant dense<0.000000e+00> : vector<2x8xf32>
    %79 = vector.multi_reduction <add>, %78, %cst_27 [1] : vector<2x8x8xf32> to vector<2x8xf32>
    %80 = vector.shape_cast %79 : vector<2x8xf32> to vector<2x1x8xf32>
    %cst_28 = arith.constant 8.000000e+00 : f32
    %81 = vector.broadcast %cst_28 : f32 to vector<2x1x8xf32>
    %82 = arith.divf %80, %81 : vector<2x1x8xf32>
    "tpu.trace_start"() <{level = 10 : i32, message = "bqk,bkd->bqd"}> : () -> ()
    %cst_29 = arith.constant dense<0.000000e+00> : vector<2x1x8xf32>
    %83 = tpu.matmul %82, %67, %cst_29 {dimension_numbers = #tpu.dot_dimension_numbers<[2], [1], [1], [2], [0, 0, 0, 1, 1, 2], [0], [0]>} : vector<2x1x8xf32>, vector<2x8x8xf32>, vector<2x1x8xf32> -> vector<2x1x8xf32>
    "tpu.trace_stop"() : () -> ()
    %84 = tpu.concatenate %26, %45, %64, %83 in 2 : vector<2x1x8xf32>, vector<2x1x8xf32>, vector<2x1x8xf32>, vector<2x1x8xf32> -> vector<2x1x32xf32>
    %85 = vector.shape_cast %84 : vector<2x1x32xf32> to vector<2x32xf32>
    %86 = vector.extract_strided_slice %0 {offsets = [0, 96], sizes = [32, 32], strides = [1, 1]} : vector<32x128xf32> to vector<32x32xf32>
    %cst_30 = arith.constant dense<0.000000e+00> : vector<2x32xf32>
    %87 = tpu.matmul %85, %86, %cst_30 {dimension_numbers = #tpu.dot_dimension_numbers<[1], [0], [0], [1], [0, 0, 1, 1], [], []>} : vector<2x32xf32>, vector<32x32xf32>, vector<2x32xf32> -> vector<2x32xf32>
    %88 = vector.extract_strided_slice %1 {offsets = [0, 96], sizes = [1, 32], strides = [1, 1]} : vector<1x128xf32> to vector<1x32xf32>
    %89 = vector.broadcast %88 : vector<1x32xf32> to vector<2x32xf32>
    %90 = arith.addf %87, %89 : vector<2x32xf32>
    %cst_31 = arith.constant 0.000000e+00 : f32
    %91 = vector.broadcast %cst_31 : f32 to vector<2x32xf32>
    %92 = arith.maximumf %90, %91 : vector<2x32xf32>
    %c0_32 = arith.constant 0 : index
    %c0_33 = arith.constant 0 : index
    %93 = vector.load %arg3[%c0_32, %c0_33] : memref<32x8xf32, #tpu.memory_space<vmem>>, vector<32x8xf32>
    %cst_34 = arith.constant dense<0.000000e+00> : vector<2x8xf32>
    %94 = tpu.matmul %92, %93, %cst_34 {dimension_numbers = #tpu.dot_dimension_numbers<[1], [0], [0], [1], [0, 0, 1, 1], [], []>} : vector<2x32xf32>, vector<32x8xf32>, vector<2x8xf32> -> vector<2x8xf32>
    %c0_35 = arith.constant 0 : index
    %c0_36 = arith.constant 0 : index
    %95 = vector.load %arg4[%c0_35, %c0_36] : memref<1x8xf32, #tpu.memory_space<vmem>>, vector<1x8xf32>
    %96 = vector.broadcast %95 : vector<1x8xf32> to vector<2x8xf32>
    %97 = arith.addf %94, %96 : vector<2x8xf32>
    %c0_37 = arith.constant 0 : index
    %c0_38 = arith.constant 0 : index
    %98 = vector.load %arg5[%c0_37, %c0_38] : memref<2x8xf32, #tpu.memory_space<vmem>>, vector<2x8xf32>
    tpu.vector_store %arg5[%c0_37, %c0_38], %97 {strides = array<i32>} : memref<2x8xf32, #tpu.memory_space<vmem>>, vector<2x8xf32>,
    return
  }
}

</mosaic_0001>

<llo_original>
// kernel: tpu_custom_call.1
$region0: #{tpu_custom_call.1}
  #allocation0 [shape = 'u32[]', space=smem, size = 0x4, offset = 0x4, fixed_abs, tag = 'smem constant byte address 0x4 - core index']
  #allocation1 [shape = 'u32[144,128]{1,0:T(1,128)}', space=vmem, size = 0x12000, scoped, tag = 'internal scratch']
  %s0 = inlined_call_operand.hbm [shape: f32[2,8,32], index: 0, kind: input, shape index: {}]
  %s1 = inlined_call_operand.vmem [shape: f32[32,128], index: 1, kind: input, shape index: {}]
  %s2 = inlined_call_operand.vmem [shape: f32[1,128], index: 2, kind: input, shape index: {}]
  %s3 = inlined_call_operand.vmem [shape: f32[32,8], index: 3, kind: input, shape index: {}]
  %s4 = inlined_call_operand.vmem [shape: f32[1,8], index: 4, kind: input, shape index: {}]
  %s5 = inlined_call_operand.hbm [shape: f32[2,8], index: 5, kind: output, shape index: {}]
  %s6 = sld [smem:[#allocation0]]
  $region34: #{tpu_custom_call.1} parent=0
    _
  %s8 = ssub.s32 1, %s6
  %s9 = scalar_select 0, %s8, %s6
  $region1: #{tpu_custom_call.1} parent=0
    #allocation2 [shape = 'u8[8192]{0}', space=vmem, size = 0x2000, scoped, tag = 'input window, operand 0, single buffered']
    #allocation3 [shape = 's32[1]{0}', space=sflag, size = 0x4, scoped, tag = 'scoped memory for tpu_custom_call.1']
    #allocation4 [shape = 's32[1]{0}', space=sflag, size = 0x4, scoped, tag = 'scoped memory for tpu_custom_call.1']
    #allocation5 [shape = 'u8[1024]{0}', space=vmem, size = 0x400, scoped, tag = 'output window, operand 0, single buffered']
    %10 = vsyncpa [#allocation3], 0
    %11 = vsyncpa [#allocation4], 0
    // Predicated region
    $region2: #{tpu_custom_call.1} parent=1 // pred_check
      _
    $region3: #{tpu_custom_call.1} parent=1 // pred_check_branch
      %13 = sbr.rel (0) target = $region5
    $region4: #{tpu_custom_call.1} parent=1 // pred_region
      %s15 = ssub.s32 256, 256
      %16 = vsyncadd [#allocation3], %s15
      %s17 = sshll.u32 [#allocation2], 4
      %s18 = int_to_ptr.vmem [resolvable:$true] %s17
      %23 = dma.hbm_to_vmem [thread:$0]  %s0, 256, %s18, [#allocation3], 128, 128, 8
    $region5: #{tpu_custom_call.1} parent=1 // pred_fallthru
      _
    // Predicated region
    $region6: #{tpu_custom_call.1} parent=1 // pred_check
      _
    $region7: #{tpu_custom_call.1} parent=1 // pred_check_branch
      %25 = sbr.rel (0) target = $region9
    $region8: #{tpu_custom_call.1} parent=1 // pred_region
      _
    $region9: #{tpu_custom_call.1} parent=1 // pred_fallthru
      _
    // Predicated region
    $region10: #{tpu_custom_call.1} parent=1 // pred_check
      _
    $region11: #{tpu_custom_call.1} parent=1 // pred_check_branch
      %27 = sbr.rel (0) target = $region13
    $region12: #{tpu_custom_call.1} parent=1 // pred_region
      _
    $region13: #{tpu_custom_call.1} parent=1 // pred_fallthru
      _
    // Predicated region
    $region14: #{tpu_custom_call.1} parent=1 // pred_check
      _
    $region15: #{tpu_custom_call.1} parent=1 // pred_check_branch
      %29 = sbr.rel (0) target = $region17
    $region16: #{tpu_custom_call.1} parent=1 // pred_region
      _
    $region17: #{tpu_custom_call.1} parent=1 // pred_fallthru
      _
    // Predicated region
    $region18: #{tpu_custom_call.1} parent=1 // pred_check
      _
    $region19: #{tpu_custom_call.1} parent=1 // pred_check_branch
      %31 = sbr.rel (0) target = $region21
    $region20: #{tpu_custom_call.1} parent=1 // pred_region
      _
    $region21: #{tpu_custom_call.1} parent=1 // pred_fallthru
      _
    // Predicated region
    $region22: #{tpu_custom_call.1} parent=1 // pred_check
      _
    $region23: #{tpu_custom_call.1} parent=1 // pred_check_branch
      %33 = sbr.rel (0) target = $region25
    $region24: #{tpu_custom_call.1} parent=1 // pred_region
      %34 = dma.done [#allocation3], 256
    $region25: #{tpu_custom_call.1} parent=1 // pred_fallthru
      _
    %v35 = vld [vmem:[%s1] sm:$0xff]
    %v36 = vld [vmem:[%s1 + $0x8] sm:$0xff]
    %v37 = vld [vmem:[%s1 + $0x10] sm:$0xff]
    %v38 = vld [vmem:[%s1 + $0x18] sm:$0xff]
    %v39 = vld [vmem:[%s2] sm:$0x1]
    %v40 = vld [vmem:[#allocation2] sm:$0xff]
    %v41 = vld [vmem:[#allocation2 + $0x8] sm:$0xff]
    %v43 = vlaneseq
    %v44 = vshrl.u32 %v43, 7
    %v45 = vsub.s32 0, %v44
    %v46 = vrot.slane %v39, %v45
    %vm48 = vcmask 261120
    %v50 = vsel %vm48, %v40, 0
    %v53 = vsel %vm48, %v41, 0
    %55 = vmatprep.subr.mxu0 0.0
    %56 = vmatpush1.msra.mxu0 0.0
    %57 = vmatprep.subr.mxu0 0.0
    %58 = vmatpush1.msra.mxu0 0.0
    %59 = vmatprep.subr.mxu0 0.0
    %60 = vmatpush1.msra.mxu0 0.0
    %61 = vmatprep.subr.mxu0 0.0
    %62 = vmatpush1.msra.mxu0 0.0
    %63 = vmatprep.subr.mxu0 0.0
    %64 = vmatpush1.msra.mxu0 0.0
    %65 = vmatprep.subr.mxu0 0.0
    %66 = vmatpush1.msra.mxu0 0.0
    %67 = vmatprep.subr.mxu0 0.0
    %68 = vmatpush1.msra.mxu0 0.0
    %69 = vmatprep.subr.mxu0 0.0
    %70 = vmatpush1.msra.mxu0 0.0
    %71 = vmatprep.subr.mxu0 0.0
    %72 = vmatpush1.msra.mxu0 0.0
    %73 = vmatprep.subr.mxu0 0.0
    %74 = vmatpush1.msra.mxu0 0.0
    %75 = vmatprep.subr.mxu0 0.0
    %76 = vmatpush1.msra.mxu0 0.0
    %77 = vmatprep.subr.mxu0 0.0
    %78 = vmatpush1.msra.mxu0 0.0
    %79 = vmatprep.subr.mxu0 0.0
    %80 = vmatpush1.msra.mxu0 %v38
    %81 = vmatprep.subr.mxu0 0.0
    %82 = vmatpush1.msra.mxu0 %v37
    %83 = vmatprep.subr.mxu0 0.0
    %84 = vmatpush1.msra.mxu0 %v36
    %85 = vmatprep.subr.mxu0 0.0
    %86 = vmatpush1.msra.mxu0 %v35
    %87 = vmatprep.subr.mxu0 0.0
    %88 = vmatpush2.msra.mxu0 0.0
    %89 = vmatprep.subr.mxu0 0.0
    %90 = vmatpush2.msra.mxu0 0.0
    %91 = vmatprep.subr.mxu0 0.0
    %92 = vmatpush2.msra.mxu0 0.0
    %93 = vmatprep.subr.mxu0 0.0
    %94 = vmatpush2.msra.mxu0 0.0
    %95 = vmatprep.subr.mxu0 0.0
    %96 = vmatpush2.msra.mxu0 0.0
    %97 = vmatprep.subr.mxu0 0.0
    %98 = vmatpush2.msra.mxu0 0.0
    %99 = vmatprep.subr.mxu0 0.0
    %100 = vmatpush2.msra.mxu0 0.0
    %101 = vmatprep.subr.mxu0 0.0
    %102 = vmatpush2.msra.mxu0 0.0
    %103 = vmatprep.subr.mxu0 0.0
    %104 = vmatpush2.msra.mxu0 0.0
    %105 = vmatprep.subr.mxu0 0.0
    %106 = vmatpush2.msra.mxu0 0.0
    %107 = vmatprep.subr.mxu0 0.0
    %108 = vmatpush2.msra.mxu0 0.0
    %109 = vmatprep.subr.mxu0 0.0
    %110 = vmatpush2.msra.mxu0 0.0
    %111 = vmatprep.subr.mxu0 0.0
    %112 = vmatpush2.msra.mxu0 0.0
    %113 = vmatprep.subr.mxu0 0.0
    %114 = vmatpush2.msra.mxu0 0.0
    %115 = vmatprep.subr.mxu0 0.0
    %116 = vmatpush2.msra.mxu0 0.0
    %117 = vmatprep.subr.mxu0 0.0
    %118 = vmatpush2.msra.mxu0 0.0
    %119 = vmatprep.mubr.f32.mxu0 0.0
    %120 = vmatmul.mubr.f32.gmra.mxu0 %v50
    %v121 = vpop.f32.mrf.mxu0
    %v122 = vadd.f32 %v46, %v121
    %v123 = vpop.f32.mrf.mxu0
    %124 = vmatprep.mubr.f32.mxu0 0.0
    %125 = vmatmul.mubr.f32.gmra.mxu0 %v53
    %v126 = vpop.f32.mrf.mxu0
    %v127 = vadd.f32 %v46, %v126
    %v128 = vpop.f32.mrf.mxu0
    %129 = vdwg.mxu0
    %131 = vrot.lane.b32.xlu0 %v122, 96
    %v132 = vpop.permute.xlu0 %131
    %vm133 = vcmask 64512
    %v134 = vsel %vm133, %v122, 0
    %v136 = vsel %vm133, %v132, 0
    %138 = vmatprep.subr.mxu0 0.0
    %139 = vmatpush1.xpose.msra.mxu0 0.0
    %140 = vmatprep.subr.mxu0 0.0
    %141 = vmatpush1.xpose.msra.mxu0 0.0
    %142 = vmatprep.subr.mxu0 0.0
    %143 = vmatpush1.xpose.msra.mxu0 0.0
    %144 = vmatprep.subr.mxu0 0.0
    %145 = vmatpush1.xpose.msra.mxu0 0.0
    %146 = vmatprep.subr.mxu0 0.0
    %147 = vmatpush1.xpose.msra.mxu0 0.0
    %148 = vmatprep.subr.mxu0 0.0
    %149 = vmatpush1.xpose.msra.mxu0 0.0
    %150 = vmatprep.subr.mxu0 0.0
    %151 = vmatpush1.xpose.msra.mxu0 0.0
    %152 = vmatprep.subr.mxu0 0.0
    %153 = vmatpush1.xpose.msra.mxu0 0.0
    %154 = vmatprep.subr.mxu0 0.0
    %155 = vmatpush1.xpose.msra.mxu0 0.0
    %156 = vmatprep.subr.mxu0 0.0
    %157 = vmatpush1.xpose.msra.mxu0 0.0
    %158 = vmatprep.subr.mxu0 0.0
    %159 = vmatpush1.xpose.msra.mxu0 0.0
    %160 = vmatprep.subr.mxu0 0.0
    %161 = vmatpush1.xpose.msra.mxu0 0.0
    %162 = vmatprep.subr.mxu0 0.0
    %163 = vmatpush1.xpose.msra.mxu0 0.0
    %164 = vmatprep.subr.mxu0 0.0
    %165 = vmatpush1.xpose.msra.mxu0 0.0
    %166 = vmatprep.subr.mxu0 0.0
    %167 = vmatpush1.xpose.msra.mxu0 0.0
    %168 = vmatprep.subr.mxu0 0.0
    %169 = vmatpush1.xpose.msra.mxu0 %v136
    %170 = vmatprep.subr.mxu0 0.0
    %171 = vmatpush2.xpose.msra.mxu0 0.0
    %172 = vmatprep.subr.mxu0 0.0
    %173 = vmatpush2.xpose.msra.mxu0 0.0
    %174 = vmatprep.subr.mxu0 0.0
    %175 = vmatpush2.xpose.msra.mxu0 0.0
    %176 = vmatprep.subr.mxu0 0.0
    %177 = vmatpush2.xpose.msra.mxu0 0.0
    %178 = vmatprep.subr.mxu0 0.0
    %179 = vmatpush2.xpose.msra.mxu0 0.0
    %180 = vmatprep.subr.mxu0 0.0
    %181 = vmatpush2.xpose.msra.mxu0 0.0
    %182 = vmatprep.subr.mxu0 0.0
    %183 = vmatpush2.xpose.msra.mxu0 0.0
    %184 = vmatprep.subr.mxu0 0.0
    %185 = vmatpush2.xpose.msra.mxu0 0.0
    %186 = vmatprep.subr.mxu0 0.0
    %187 = vmatpush2.xpose.msra.mxu0 0.0
    %188 = vmatprep.subr.mxu0 0.0
    %189 = vmatpush2.xpose.msra.mxu0 0.0
    %190 = vmatprep.subr.mxu0 0.0
    %191 = vmatpush2.xpose.msra.mxu0 0.0
    %192 = vmatprep.subr.mxu0 0.0
    %193 = vmatpush2.xpose.msra.mxu0 0.0
    %194 = vmatprep.subr.mxu0 0.0
    %195 = vmatpush2.xpose.msra.mxu0 0.0
    %196 = vmatprep.subr.mxu0 0.0
    %197 = vmatpush2.xpose.msra.mxu0 0.0
    %198 = vmatprep.subr.mxu0 0.0
    %199 = vmatpush2.xpose.msra.mxu0 0.0
    %200 = vmatprep.subr.mxu0 0.0
    %201 = vmatpush2.xpose.msra.mxu0 0.0
    %202 = vmatprep.mubr.f32.mxu0 0.0
    %203 = vmatmul.mubr.f32.gmra.mxu0 %v134
    %v204 = vpop.f32.mrf.mxu0
    %v205 = vadd.f32 0.0, %v204
    %v206 = vpop.f32.mrf.mxu0
    %207 = vdwg.mxu0
    %209 = vrot.lane.b32.xlu0 %v127, 96
    %v210 = vpop.permute.xlu0 %209
    %v211 = vsel %vm133, %v127, 0
    %v213 = vsel %vm133, %v210, 0
    %215 = vmatprep.subr.mxu0 0.0
    %216 = vmatpush1.xpose.msra.mxu0 0.0
    %217 = vmatprep.subr.mxu0 0.0
    %218 = vmatpush1.xpose.msra.mxu0 0.0
    %219 = vmatprep.subr.mxu0 0.0
    %220 = vmatpush1.xpose.msra.mxu0 0.0
    %221 = vmatprep.subr.mxu0 0.0
    %222 = vmatpush1.xpose.msra.mxu0 0.0
    %223 = vmatprep.subr.mxu0 0.0
    %224 = vmatpush1.xpose.msra.mxu0 0.0
    %225 = vmatprep.subr.mxu0 0.0
    %226 = vmatpush1.xpose.msra.mxu0 0.0
    %227 = vmatprep.subr.mxu0 0.0
    %228 = vmatpush1.xpose.msra.mxu0 0.0
    %229 = vmatprep.subr.mxu0 0.0
    %230 = vmatpush1.xpose.msra.mxu0 0.0
    %231 = vmatprep.subr.mxu0 0.0
    %232 = vmatpush1.xpose.msra.mxu0 0.0
    %233 = vmatprep.subr.mxu0 0.0
    %234 = vmatpush1.xpose.msra.mxu0 0.0
    %235 = vmatprep.subr.mxu0 0.0
    %236 = vmatpush1.xpose.msra.mxu0 0.0
    %237 = vmatprep.subr.mxu0 0.0
    %238 = vmatpush1.xpose.msra.mxu0 0.0
    %239 = vmatprep.subr.mxu0 0.0
    %240 = vmatpush1.xpose.msra.mxu0 0.0
    %241 = vmatprep.subr.mxu0 0.0
    %242 = vmatpush1.xpose.msra.mxu0 0.0
    %243 = vmatprep.subr.mxu0 0.0
    %244 = vmatpush1.xpose.msra.mxu0 0.0
    %245 = vmatprep.subr.mxu0 0.0
    %246 = vmatpush1.xpose.msra.mxu0 %v213
    %247 = vmatprep.subr.mxu0 0.0
    %248 = vmatpush2.xpose.msra.mxu0 0.0
    %249 = vmatprep.subr.mxu0 0.0
    %250 = vmatpush2.xpose.msra.mxu0 0.0
    %251 = vmatprep.subr.mxu0 0.0
    %252 = vmatpush2.xpose.msra.mxu0 0.0
    %253 = vmatprep.subr.mxu0 0.0
    %254 = vmatpush2.xpose.msra.mxu0 0.0
    %255 = vmatprep.subr.mxu0 0.0
    %256 = vmatpush2.xpose.msra.mxu0 0.0
    %257 = vmatprep.subr.mxu0 0.0
    %258 = vmatpush2.xpose.msra.mxu0 0.0
    %259 = vmatprep.subr.mxu0 0.0
    %260 = vmatpush2.xpose.msra.mxu0 0.0
    %261 = vmatprep.subr.mxu0 0.0
    %262 = vmatpush2.xpose.msra.mxu0 0.0
    %263 = vmatprep.subr.mxu0 0.0
    %264 = vmatpush2.xpose.msra.mxu0 0.0
    %265 = vmatprep.subr.mxu0 0.0
    %266 = vmatpush2.xpose.msra.mxu0 0.0
    %267 = vmatprep.subr.mxu0 0.0
    %268 = vmatpush2.xpose.msra.mxu0 0.0
    %269 = vmatprep.subr.mxu0 0.0
    %270 = vmatpush2.xpose.msra.mxu0 0.0
    %271 = vmatprep.subr.mxu0 0.0
    %272 = vmatpush2.xpose.msra.mxu0 0.0
    %273 = vmatprep.subr.mxu0 0.0
    %274 = vmatpush2.xpose.msra.mxu0 0.0
    %275 = vmatprep.subr.mxu0 0.0
    %276 = vmatpush2.xpose.msra.mxu0 0.0
    %277 = vmatprep.subr.mxu0 0.0
    %278 = vmatpush2.xpose.msra.mxu0 0.0
    %279 = vmatprep.mubr.f32.mxu0 0.0
    %280 = vmatmul.mubr.f32.gmra.mxu0 %v211
    %v281 = vpop.f32.mrf.mxu0
    %v282 = vadd.f32 0.0, %v281
    %v283 = vpop.f32.mrf.mxu0
    %284 = vdwg.mxu0
    %v285 = vsel %vm133, %v205, -inf
    %v286 = vrot.slane %v285, 4
    %v287 = vmax.f32 %v285, %v286
    %v288 = vrot.slane %v287, 2
    %v289 = vmax.f32 %v287, %v288
    %v290 = vrot.slane %v289, 1
    %v291 = vmax.f32 %v289, %v290
    %v292 = vsel %vm133, %v282, -inf
    %v293 = vrot.slane %v292, 4
    %v294 = vmax.f32 %v292, %v293
    %v295 = vrot.slane %v294, 2
    %v296 = vmax.f32 %v294, %v295
    %v297 = vrot.slane %v296, 1
    %v298 = vmax.f32 %v296, %v297
    %v299 = vsub.f32 %v205, %v291
    %v300 = vsub.f32 %v282, %v298
    %v301 = vmul.f32 %v299, 1.442695
    %v302 = vpow.pop %v301
    %v303 = vmul.f32 %v300, 1.442695
    %v304 = vpow.pop %v303
    %v305 = vsel %vm133, %v302, 0.0
    %v306 = vrot.slane %v305, 4
    %v307 = vadd.f32 %v305, %v306
    %v308 = vrot.slane %v307, 2
    %v309 = vadd.f32 %v307, %v308
    %v310 = vrot.slane %v309, 1
    %v311 = vadd.f32 %v309, %v310
    %v312 = vsel %vm133, %v304, 0.0
    %v313 = vrot.slane %v312, 4
    %v314 = vadd.f32 %v312, %v313
    %v315 = vrot.slane %v314, 2
    %v316 = vadd.f32 %v314, %v315
    %v317 = vrot.slane %v316, 1
    %v318 = vadd.f32 %v316, %v317
    %v319 = vrcp.pop %v311
    %v320 = vrcp.pop %v318
    %v321 = vmul.f32 %v302, %v319
    %v322 = vmul.f32 %v304, %v320
    %v323 = vsel %vm133, %v321, 0.0
    %v324 = vrot.slane %v323, 4
    %v325 = vadd.f32 %v323, %v324
    %v326 = vrot.slane %v325, 2
    %v327 = vadd.f32 %v325, %v326
    %v328 = vrot.slane %v327, 1
    %v329 = vadd.f32 %v327, %v328
    %v330 = vsel %vm133, %v322, 0.0
    %v331 = vrot.slane %v330, 4
    %v332 = vadd.f32 %v330, %v331
    %v333 = vrot.slane %v332, 2
    %v334 = vadd.f32 %v332, %v333
    %v335 = vrot.slane %v334, 1
    %v336 = vadd.f32 %v334, %v335
    %v337 = vrcp.pop 8.0
    %v338 = vmul.f32 %v329, %v337
    %v339 = vmul.f32 %v336, %v337
    %340 = vrot.lane.b32.xlu0 %v122, 64
    %v341 = vpop.permute.xlu0 %340
    %v344 = vsel %vm133, %v338, 0
    %346 = vmatprep.subr.mxu0 0.0
    %347 = vmatpush1.msra.mxu0 0.0
    %348 = vmatprep.subr.mxu0 0.0
    %349 = vmatpush1.msra.mxu0 0.0
    %350 = vmatprep.subr.mxu0 0.0
    %351 = vmatpush1.msra.mxu0 0.0
    %352 = vmatprep.subr.mxu0 0.0
    %353 = vmatpush1.msra.mxu0 0.0
    %354 = vmatprep.subr.mxu0 0.0
    %355 = vmatpush1.msra.mxu0 0.0
    %356 = vmatprep.subr.mxu0 0.0
    %357 = vmatpush1.msra.mxu0 0.0
    %358 = vmatprep.subr.mxu0 0.0
    %359 = vmatpush1.msra.mxu0 0.0
    %360 = vmatprep.subr.mxu0 0.0
    %361 = vmatpush1.msra.mxu0 0.0
    %362 = vmatprep.subr.mxu0 0.0
    %363 = vmatpush1.msra.mxu0 0.0
    %364 = vmatprep.subr.mxu0 0.0
    %365 = vmatpush1.msra.mxu0 0.0
    %366 = vmatprep.subr.mxu0 0.0
    %367 = vmatpush1.msra.mxu0 0.0
    %368 = vmatprep.subr.mxu0 0.0
    %369 = vmatpush1.msra.mxu0 0.0
    %370 = vmatprep.subr.mxu0 0.0
    %371 = vmatpush1.msra.mxu0 0.0
    %372 = vmatprep.subr.mxu0 0.0
    %373 = vmatpush1.msra.mxu0 0.0
    %374 = vmatprep.subr.mxu0 0.0
    %375 = vmatpush1.msra.mxu0 0.0
    %376 = vmatprep.subr.mxu0 0.0
    %377 = vmatpush1.msra.mxu0 %v341
    %378 = vmatprep.subr.mxu0 0.0
    %379 = vmatpush2.msra.mxu0 0.0
    %380 = vmatprep.subr.mxu0 0.0
    %381 = vmatpush2.msra.mxu0 0.0
    %382 = vmatprep.subr.mxu0 0.0
    %383 = vmatpush2.msra.mxu0 0.0
    %384 = vmatprep.subr.mxu0 0.0
    %385 = vmatpush2.msra.mxu0 0.0
    %386 = vmatprep.subr.mxu0 0.0
    %387 = vmatpush2.msra.mxu0 0.0
    %388 = vmatprep.subr.mxu0 0.0
    %389 = vmatpush2.msra.mxu0 0.0
    %390 = vmatprep.subr.mxu0 0.0
    %391 = vmatpush2.msra.mxu0 0.0
    %392 = vmatprep.subr.mxu0 0.0
    %393 = vmatpush2.msra.mxu0 0.0
    %394 = vmatprep.subr.mxu0 0.0
    %395 = vmatpush2.msra.mxu0 0.0
    %396 = vmatprep.subr.mxu0 0.0
    %397 = vmatpush2.msra.mxu0 0.0
    %398 = vmatprep.subr.mxu0 0.0
    %399 = vmatpush2.msra.mxu0 0.0
    %400 = vmatprep.subr.mxu0 0.0
    %401 = vmatpush2.msra.mxu0 0.0
    %402 = vmatprep.subr.mxu0 0.0
    %403 = vmatpush2.msra.mxu0 0.0
    %404 = vmatprep.subr.mxu0 0.0
    %405 = vmatpush2.msra.mxu0 0.0
    %406 = vmatprep.subr.mxu0 0.0
    %407 = vmatpush2.msra.mxu0 0.0
    %408 = vmatprep.subr.mxu0 0.0
    %409 = vmatpush2.msra.mxu0 0.0
    %410 = vmatprep.mubr.f32.mxu0 0.0
    %411 = vmatmul.mubr.f32.gmra.mxu0 %v344
    %v412 = vpop.f32.mrf.mxu0
    %v413 = vadd.f32 0.0, %v412
    %v414 = vpop.f32.mrf.mxu0
    %415 = vdwg.mxu0
    %416 = vrot.lane.b32.xlu0 %v127, 64
    %v417 = vpop.permute.xlu0 %416
    %v420 = vsel %vm133, %v339, 0
    %422 = vmatprep.subr.mxu0 0.0
    %423 = vmatpush1.msra.mxu0 0.0
    %424 = vmatprep.subr.mxu0 0.0
    %425 = vmatpush1.msra.mxu0 0.0
    %426 = vmatprep.subr.mxu0 0.0
    %427 = vmatpush1.msra.mxu0 0.0
    %428 = vmatprep.subr.mxu0 0.0
    %429 = vmatpush1.msra.mxu0 0.0
    %430 = vmatprep.subr.mxu0 0.0
    %431 = vmatpush1.msra.mxu0 0.0
    %432 = vmatprep.subr.mxu0 0.0
    %433 = vmatpush1.msra.mxu0 0.0
    %434 = vmatprep.subr.mxu0 0.0
    %435 = vmatpush1.msra.mxu0 0.0
    %436 = vmatprep.subr.mxu0 0.0
    %437 = vmatpush1.msra.mxu0 0.0
    %438 = vmatprep.subr.mxu0 0.0
    %439 = vmatpush1.msra.mxu0 0.0
    %440 = vmatprep.subr.mxu0 0.0
    %441 = vmatpush1.msra.mxu0 0.0
    %442 = vmatprep.subr.mxu0 0.0
    %443 = vmatpush1.msra.mxu0 0.0
    %444 = vmatprep.subr.mxu0 0.0
    %445 = vmatpush1.msra.mxu0 0.0
    %446 = vmatprep.subr.mxu0 0.0
    %447 = vmatpush1.msra.mxu0 0.0
    %448 = vmatprep.subr.mxu0 0.0
    %449 = vmatpush1.msra.mxu0 0.0
    %450 = vmatprep.subr.mxu0 0.0
    %451 = vmatpush1.msra.mxu0 0.0
    %452 = vmatprep.subr.mxu0 0.0
    %453 = vmatpush1.msra.mxu0 %v417
    %454 = vmatprep.subr.mxu0 0.0
    %455 = vmatpush2.msra.mxu0 0.0
    %456 = vmatprep.subr.mxu0 0.0
    %457 = vmatpush2.msra.mxu0 0.0
    %458 = vmatprep.subr.mxu0 0.0
    %459 = vmatpush2.msra.mxu0 0.0
    %460 = vmatprep.subr.mxu0 0.0
    %461 = vmatpush2.msra.mxu0 0.0
    %462 = vmatprep.subr.mxu0 0.0
    %463 = vmatpush2.msra.mxu0 0.0
    %464 = vmatprep.subr.mxu0 0.0
    %465 = vmatpush2.msra.mxu0 0.0
    %466 = vmatprep.subr.mxu0 0.0
    %467 = vmatpush2.msra.mxu0 0.0
    %468 = vmatprep.subr.mxu0 0.0
    %469 = vmatpush2.msra.mxu0 0.0
    %470 = vmatprep.subr.mxu0 0.0
    %471 = vmatpush2.msra.mxu0 0.0
    %472 = vmatprep.subr.mxu0 0.0
    %473 = vmatpush2.msra.mxu0 0.0
    %474 = vmatprep.subr.mxu0 0.0
    %475 = vmatpush2.msra.mxu0 0.0
    %476 = vmatprep.subr.mxu0 0.0
    %477 = vmatpush2.msra.mxu0 0.0
    %478 = vmatprep.subr.mxu0 0.0
    %479 = vmatpush2.msra.mxu0 0.0
    %480 = vmatprep.subr.mxu0 0.0
    %481 = vmatpush2.msra.mxu0 0.0
    %482 = vmatprep.subr.mxu0 0.0
    %483 = vmatpush2.msra.mxu0 0.0
    %484 = vmatprep.subr.mxu0 0.0
    %485 = vmatpush2.msra.mxu0 0.0
    %486 = vmatprep.mubr.f32.mxu0 0.0
    %487 = vmatmul.mubr.f32.gmra.mxu0 %v420
    %v488 = vpop.f32.mrf.mxu0
    %v489 = vadd.f32 0.0, %v488
    %v490 = vpop.f32.mrf.mxu0
    %491 = vdwg.mxu0
    %492 = vrot.lane.b32.xlu0 %v122, 120
    %v493 = vpop.permute.xlu0 %492
    %494 = vrot.lane.b32.xlu0 %v122, 88
    %v495 = vpop.permute.xlu0 %494
    %v496 = vsel %vm133, %v493, 0
    %v498 = vsel %vm133, %v495, 0
    %500 = vmatprep.subr.mxu0 0.0
    %501 = vmatpush1.xpose.msra.mxu0 0.0
    %502 = vmatprep.subr.mxu0 0.0
    %503 = vmatpush1.xpose.msra.mxu0 0.0
    %504 = vmatprep.subr.mxu0 0.0
    %505 = vmatpush1.xpose.msra.mxu0 0.0
    %506 = vmatprep.subr.mxu0 0.0
    %507 = vmatpush1.xpose.msra.mxu0 0.0
    %508 = vmatprep.subr.mxu0 0.0
    %509 = vmatpush1.xpose.msra.mxu0 0.0
    %510 = vmatprep.subr.mxu0 0.0
    %511 = vmatpush1.xpose.msra.mxu0 0.0
    %512 = vmatprep.subr.mxu0 0.0
    %513 = vmatpush1.xpose.msra.mxu0 0.0
    %514 = vmatprep.subr.mxu0 0.0
    %515 = vmatpush1.xpose.msra.mxu0 0.0
    %516 = vmatprep.subr.mxu0 0.0
    %517 = vmatpush1.xpose.msra.mxu0 0.0
    %518 = vmatprep.subr.mxu0 0.0
    %519 = vmatpush1.xpose.msra.mxu0 0.0
    %520 = vmatprep.subr.mxu0 0.0
    %521 = vmatpush1.xpose.msra.mxu0 0.0
    %522 = vmatprep.subr.mxu0 0.0
    %523 = vmatpush1.xpose.msra.mxu0 0.0
    %524 = vmatprep.subr.mxu0 0.0
    %525 = vmatpush1.xpose.msra.mxu0 0.0
    %526 = vmatprep.subr.mxu0 0.0
    %527 = vmatpush1.xpose.msra.mxu0 0.0
    %528 = vmatprep.subr.mxu0 0.0
    %529 = vmatpush1.xpose.msra.mxu0 0.0
    %530 = vmatprep.subr.mxu0 0.0
    %531 = vmatpush1.xpose.msra.mxu0 %v498
    %532 = vmatprep.subr.mxu0 0.0
    %533 = vmatpush2.xpose.msra.mxu0 0.0
    %534 = vmatprep.subr.mxu0 0.0
    %535 = vmatpush2.xpose.msra.mxu0 0.0
    %536 = vmatprep.subr.mxu0 0.0
    %537 = vmatpush2.xpose.msra.mxu0 0.0
    %538 = vmatprep.subr.mxu0 0.0
    %539 = vmatpush2.xpose.msra.mxu0 0.0
    %540 = vmatprep.subr.mxu0 0.0
    %541 = vmatpush2.xpose.msra.mxu0 0.0
    %542 = vmatprep.subr.mxu0 0.0
    %543 = vmatpush2.xpose.msra.mxu0 0.0
    %544 = vmatprep.subr.mxu0 0.0
    %545 = vmatpush2.xpose.msra.mxu0 0.0
    %546 = vmatprep.subr.mxu0 0.0
    %547 = vmatpush2.xpose.msra.mxu0 0.0
    %548 = vmatprep.subr.mxu0 0.0
    %549 = vmatpush2.xpose.msra.mxu0 0.0
    %550 = vmatprep.subr.mxu0 0.0
    %551 = vmatpush2.xpose.msra.mxu0 0.0
    %552 = vmatprep.subr.mxu0 0.0
    %553 = vmatpush2.xpose.msra.mxu0 0.0
    %554 = vmatprep.subr.mxu0 0.0
    %555 = vmatpush2.xpose.msra.mxu0 0.0
    %556 = vmatprep.subr.mxu0 0.0
    %557 = vmatpush2.xpose.msra.mxu0 0.0
    %558 = vmatprep.subr.mxu0 0.0
    %559 = vmatpush2.xpose.msra.mxu0 0.0
    %560 = vmatprep.subr.mxu0 0.0
    %561 = vmatpush2.xpose.msra.mxu0 0.0
    %562 = vmatprep.subr.mxu0 0.0
    %563 = vmatpush2.xpose.msra.mxu0 0.0
    %564 = vmatprep.mubr.f32.mxu0 0.0
    %565 = vmatmul.mubr.f32.gmra.mxu0 %v496
    %v566 = vpop.f32.mrf.mxu0
    %v567 = vadd.f32 0.0, %v566
    %v568 = vpop.f32.mrf.mxu0
    %569 = vdwg.mxu0
    %570 = vrot.lane.b32.xlu0 %v127, 120
    %v571 = vpop.permute.xlu0 %570
    %572 = vrot.lane.b32.xlu0 %v127, 88
    %v573 = vpop.permute.xlu0 %572
    %v574 = vsel %vm133, %v571, 0
    %v576 = vsel %vm133, %v573, 0
    %578 = vmatprep.subr.mxu0 0.0
    %579 = vmatpush1.xpose.msra.mxu0 0.0
    %580 = vmatprep.subr.mxu0 0.0
    %581 = vmatpush1.xpose.msra.mxu0 0.0
    %582 = vmatprep.subr.mxu0 0.0
    %583 = vmatpush1.xpose.msra.mxu0 0.0
    %584 = vmatprep.subr.mxu0 0.0
    %585 = vmatpush1.xpose.msra.mxu0 0.0
    %586 = vmatprep.subr.mxu0 0.0
    %587 = vmatpush1.xpose.msra.mxu0 0.0
    %588 = vmatprep.subr.mxu0 0.0
    %589 = vmatpush1.xpose.msra.mxu0 0.0
    %590 = vmatprep.subr.mxu0 0.0
    %591 = vmatpush1.xpose.msra.mxu0 0.0
    %592 = vmatprep.subr.mxu0 0.0
    %593 = vmatpush1.xpose.msra.mxu0 0.0
    %594 = vmatprep.subr.mxu0 0.0
    %595 = vmatpush1.xpose.msra.mxu0 0.0
    %596 = vmatprep.subr.mxu0 0.0
    %597 = vmatpush1.xpose.msra.mxu0 0.0
    %598 = vmatprep.subr.mxu0 0.0
    %599 = vmatpush1.xpose.msra.mxu0 0.0
    %600 = vmatprep.subr.mxu0 0.0
    %601 = vmatpush1.xpose.msra.mxu0 0.0
    %602 = vmatprep.subr.mxu0 0.0
    %603 = vmatpush1.xpose.msra.mxu0 0.0
    %604 = vmatprep.subr.mxu0 0.0
    %605 = vmatpush1.xpose.msra.mxu0 0.0
    %606 = vmatprep.subr.mxu0 0.0
    %607 = vmatpush1.xpose.msra.mxu0 0.0
    %608 = vmatprep.subr.mxu0 0.0
    %609 = vmatpush1.xpose.msra.mxu0 %v576
    %610 = vmatprep.subr.mxu0 0.0
    %611 = vmatpush2.xpose.msra.mxu0 0.0
    %612 = vmatprep.subr.mxu0 0.0
    %613 = vmatpush2.xpose.msra.mxu0 0.0
    %614 = vmatprep.subr.mxu0 0.0
    %615 = vmatpush2.xpose.msra.mxu0 0.0
    %616 = vmatprep.subr.mxu0 0.0
    %617 = vmatpush2.xpose.msra.mxu0 0.0
    %618 = vmatprep.subr.mxu0 0.0
    %619 = vmatpush2.xpose.msra.mxu0 0.0
    %620 = vmatprep.subr.mxu0 0.0
    %621 = vmatpush2.xpose.msra.mxu0 0.0
    %622 = vmatprep.subr.mxu0 0.0
    %623 = vmatpush2.xpose.msra.mxu0 0.0
    %624 = vmatprep.subr.mxu0 0.0
    %625 = vmatpush2.xpose.msra.mxu0 0.0
    %626 = vmatprep.subr.mxu0 0.0
    %627 = vmatpush2.xpose.msra.mxu0 0.0
    %628 = vmatprep.subr.mxu0 0.0
    %629 = vmatpush2.xpose.msra.mxu0 0.0
    %630 = vmatprep.subr.mxu0 0.0
    %631 = vmatpush2.xpose.msra.mxu0 0.0
    %632 = vmatprep.subr.mxu0 0.0
    %633 = vmatpush2.xpose.msra.mxu0 0.0
    %634 = vmatprep.subr.mxu0 0.0
    %635 = vmatpush2.xpose.msra.mxu0 0.0
    %636 = vmatprep.subr.mxu0 0.0
    %637 = vmatpush2.xpose.msra.mxu0 0.0
    %638 = vmatprep.subr.mxu0 0.0
    %639 = vmatpush2.xpose.msra.mxu0 0.0
    %640 = vmatprep.subr.mxu0 0.0
    %641 = vmatpush2.xpose.msra.mxu0 0.0
    %642 = vmatprep.mubr.f32.mxu0 0.0
    %643 = vmatmul.mubr.f32.gmra.mxu0 %v574
    %v644 = vpop.f32.mrf.mxu0
    %v645 = vadd.f32 0.0, %v644
    %v646 = vpop.f32.mrf.mxu0
    %647 = vdwg.mxu0
    %v648 = vsel %vm133, %v567, -inf
    %v649 = vrot.slane %v648, 4
    %v650 = vmax.f32 %v648, %v649
    %v651 = vrot.slane %v650, 2
    %v652 = vmax.f32 %v650, %v651
    %v653 = vrot.slane %v652, 1
    %v654 = vmax.f32 %v652, %v653
    %v655 = vsel %vm133, %v645, -inf
    %v656 = vrot.slane %v655, 4
    %v657 = vmax.f32 %v655, %v656
    %v658 = vrot.slane %v657, 2
    %v659 = vmax.f32 %v657, %v658
    %v660 = vrot.slane %v659, 1
    %v661 = vmax.f32 %v659, %v660
    %v662 = vsub.f32 %v567, %v654
    %v663 = vsub.f32 %v645, %v661
    %v664 = vmul.f32 %v662, 1.442695
    %v665 = vpow.pop %v664
    %v666 = vmul.f32 %v663, 1.442695
    %v667 = vpow.pop %v666
    %v668 = vsel %vm133, %v665, 0.0
    %v669 = vrot.slane %v668, 4
    %v670 = vadd.f32 %v668, %v669
    %v671 = vrot.slane %v670, 2
    %v672 = vadd.f32 %v670, %v671
    %v673 = vrot.slane %v672, 1
    %v674 = vadd.f32 %v672, %v673
    %v675 = vsel %vm133, %v667, 0.0
    %v676 = vrot.slane %v675, 4
    %v677 = vadd.f32 %v675, %v676
    %v678 = vrot.slane %v677, 2
    %v679 = vadd.f32 %v677, %v678
    %v680 = vrot.slane %v679, 1
    %v681 = vadd.f32 %v679, %v680
    %v682 = vrcp.pop %v674
    %v683 = vrcp.pop %v681
    %v684 = vmul.f32 %v665, %v682
    %v685 = vmul.f32 %v667, %v683
    %v686 = vsel %vm133, %v684, 0.0
    %v687 = vrot.slane %v686, 4
    %v688 = vadd.f32 %v686, %v687
    %v689 = vrot.slane %v688, 2
    %v690 = vadd.f32 %v688, %v689
    %v691 = vrot.slane %v690, 1
    %v692 = vadd.f32 %v690, %v691
    %v693 = vsel %vm133, %v685, 0.0
    %v694 = vrot.slane %v693, 4
    %v695 = vadd.f32 %v693, %v694
    %v696 = vrot.slane %v695, 2
    %v697 = vadd.f32 %v695, %v696
    %v698 = vrot.slane %v697, 1
    %v699 = vadd.f32 %v697, %v698
    %v700 = vmul.f32 %v692, %v337
    %v701 = vmul.f32 %v699, %v337
    %702 = vrot.lane.b32.xlu0 %v122, 56
    %v703 = vpop.permute.xlu0 %702
    %v706 = vsel %vm133, %v700, 0
    %708 = vmatprep.subr.mxu0 0.0
    %709 = vmatpush1.msra.mxu0 0.0
    %710 = vmatprep.subr.mxu0 0.0
    %711 = vmatpush1.msra.mxu0 0.0
    %712 = vmatprep.subr.mxu0 0.0
    %713 = vmatpush1.msra.mxu0 0.0
    %714 = vmatprep.subr.mxu0 0.0
    %715 = vmatpush1.msra.mxu0 0.0
    %716 = vmatprep.subr.mxu0 0.0
    %717 = vmatpush1.msra.mxu0 0.0
    %718 = vmatprep.subr.mxu0 0.0
    %719 = vmatpush1.msra.mxu0 0.0
    %720 = vmatprep.subr.mxu0 0.0
    %721 = vmatpush1.msra.mxu0 0.0
    %722 = vmatprep.subr.mxu0 0.0
    %723 = vmatpush1.msra.mxu0 0.0
    %724 = vmatprep.subr.mxu0 0.0
    %725 = vmatpush1.msra.mxu0 0.0
    %726 = vmatprep.subr.mxu0 0.0
    %727 = vmatpush1.msra.mxu0 0.0
    %728 = vmatprep.subr.mxu0 0.0
    %729 = vmatpush1.msra.mxu0 0.0
    %730 = vmatprep.subr.mxu0 0.0
    %731 = vmatpush1.msra.mxu0 0.0
    %732 = vmatprep.subr.mxu0 0.0
    %733 = vmatpush1.msra.mxu0 0.0
    %734 = vmatprep.subr.mxu0 0.0
    %735 = vmatpush1.msra.mxu0 0.0
    %736 = vmatprep.subr.mxu0 0.0
    %737 = vmatpush1.msra.mxu0 0.0
    %738 = vmatprep.subr.mxu0 0.0
    %739 = vmatpush1.msra.mxu0 %v703
    %740 = vmatprep.subr.mxu0 0.0
    %741 = vmatpush2.msra.mxu0 0.0
    %742 = vmatprep.subr.mxu0 0.0
    %743 = vmatpush2.msra.mxu0 0.0
    %744 = vmatprep.subr.mxu0 0.0
    %745 = vmatpush2.msra.mxu0 0.0
    %746 = vmatprep.subr.mxu0 0.0
    %747 = vmatpush2.msra.mxu0 0.0
    %748 = vmatprep.subr.mxu0 0.0
    %749 = vmatpush2.msra.mxu0 0.0
    %750 = vmatprep.subr.mxu0 0.0
    %751 = vmatpush2.msra.mxu0 0.0
    %752 = vmatprep.subr.mxu0 0.0
    %753 = vmatpush2.msra.mxu0 0.0
    %754 = vmatprep.subr.mxu0 0.0
    %755 = vmatpush2.msra.mxu0 0.0
    %756 = vmatprep.subr.mxu0 0.0
    %757 = vmatpush2.msra.mxu0 0.0
    %758 = vmatprep.subr.mxu0 0.0
    %759 = vmatpush2.msra.mxu0 0.0
    %760 = vmatprep.subr.mxu0 0.0
    %761 = vmatpush2.msra.mxu0 0.0
    %762 = vmatprep.subr.mxu0 0.0
    %763 = vmatpush2.msra.mxu0 0.0
    %764 = vmatprep.subr.mxu0 0.0
    %765 = vmatpush2.msra.mxu0 0.0
    %766 = vmatprep.subr.mxu0 0.0
    %767 = vmatpush2.msra.mxu0 0.0
    %768 = vmatprep.subr.mxu0 0.0
    %769 = vmatpush2.msra.mxu0 0.0
    %770 = vmatprep.subr.mxu0 0.0
    %771 = vmatpush2.msra.mxu0 0.0
    %772 = vmatprep.mubr.f32.mxu0 0.0
    %773 = vmatmul.mubr.f32.gmra.mxu0 %v706
    %v774 = vpop.f32.mrf.mxu0
    %v775 = vadd.f32 0.0, %v774
    %v776 = vpop.f32.mrf.mxu0
    %777 = vdwg.mxu0
    %778 = vrot.lane.b32.xlu0 %v127, 56
    %v779 = vpop.permute.xlu0 %778
    %v782 = vsel %vm133, %v701, 0
    %784 = vmatprep.subr.mxu0 0.0
    %785 = vmatpush1.msra.mxu0 0.0
    %786 = vmatprep.subr.mxu0 0.0
    %787 = vmatpush1.msra.mxu0 0.0
    %788 = vmatprep.subr.mxu0 0.0
    %789 = vmatpush1.msra.mxu0 0.0
    %790 = vmatprep.subr.mxu0 0.0
    %791 = vmatpush1.msra.mxu0 0.0
    %792 = vmatprep.subr.mxu0 0.0
    %793 = vmatpush1.msra.mxu0 0.0
    %794 = vmatprep.subr.mxu0 0.0
    %795 = vmatpush1.msra.mxu0 0.0
    %796 = vmatprep.subr.mxu0 0.0
    %797 = vmatpush1.msra.mxu0 0.0
    %798 = vmatprep.subr.mxu0 0.0
    %799 = vmatpush1.msra.mxu0 0.0
    %800 = vmatprep.subr.mxu0 0.0
    %801 = vmatpush1.msra.mxu0 0.0
    %802 = vmatprep.subr.mxu0 0.0
    %803 = vmatpush1.msra.mxu0 0.0
    %804 = vmatprep.subr.mxu0 0.0
    %805 = vmatpush1.msra.mxu0 0.0
    %806 = vmatprep.subr.mxu0 0.0
    %807 = vmatpush1.msra.mxu0 0.0
    %808 = vmatprep.subr.mxu0 0.0
    %809 = vmatpush1.msra.mxu0 0.0
    %810 = vmatprep.subr.mxu0 0.0
    %811 = vmatpush1.msra.mxu0 0.0
    %812 = vmatprep.subr.mxu0 0.0
    %813 = vmatpush1.msra.mxu0 0.0
    %814 = vmatprep.subr.mxu0 0.0
    %815 = vmatpush1.msra.mxu0 %v779
    %816 = vmatprep.subr.mxu0 0.0
    %817 = vmatpush2.msra.mxu0 0.0
    %818 = vmatprep.subr.mxu0 0.0
    %819 = vmatpush2.msra.mxu0 0.0
    %820 = vmatprep.subr.mxu0 0.0
    %821 = vmatpush2.msra.mxu0 0.0
    %822 = vmatprep.subr.mxu0 0.0
    %823 = vmatpush2.msra.mxu0 0.0
    %824 = vmatprep.subr.mxu0 0.0
    %825 = vmatpush2.msra.mxu0 0.0
    %826 = vmatprep.subr.mxu0 0.0
    %827 = vmatpush2.msra.mxu0 0.0
    %828 = vmatprep.subr.mxu0 0.0
    %829 = vmatpush2.msra.mxu0 0.0
    %830 = vmatprep.subr.mxu0 0.0
    %831 = vmatpush2.msra.mxu0 0.0
    %832 = vmatprep.subr.mxu0 0.0
    %833 = vmatpush2.msra.mxu0 0.0
    %834 = vmatprep.subr.mxu0 0.0
    %835 = vmatpush2.msra.mxu0 0.0
    %836 = vmatprep.subr.mxu0 0.0
    %837 = vmatpush2.msra.mxu0 0.0
    %838 = vmatprep.subr.mxu0 0.0
    %839 = vmatpush2.msra.mxu0 0.0
    %840 = vmatprep.subr.mxu0 0.0
    %841 = vmatpush2.msra.mxu0 0.0
    %842 = vmatprep.subr.mxu0 0.0
    %843 = vmatpush2.msra.mxu0 0.0
    %844 = vmatprep.subr.mxu0 0.0
    %845 = vmatpush2.msra.mxu0 0.0
    %846 = vmatprep.subr.mxu0 0.0
    %847 = vmatpush2.msra.mxu0 0.0
    %848 = vmatprep.mubr.f32.mxu0 0.0
    %849 = vmatmul.mubr.f32.gmra.mxu0 %v782
    %v850 = vpop.f32.mrf.mxu0
    %v851 = vadd.f32 0.0, %v850
    %v852 = vpop.f32.mrf.mxu0
    %853 = vdwg.mxu0
    %854 = vrot.lane.b32.xlu0 %v122, 112
    %v855 = vpop.permute.xlu0 %854
    %856 = vrot.lane.b32.xlu0 %v122, 80
    %v857 = vpop.permute.xlu0 %856
    %v858 = vsel %vm133, %v855, 0
    %v860 = vsel %vm133, %v857, 0
    %862 = vmatprep.subr.mxu0 0.0
    %863 = vmatpush1.xpose.msra.mxu0 0.0
    %864 = vmatprep.subr.mxu0 0.0
    %865 = vmatpush1.xpose.msra.mxu0 0.0
    %866 = vmatprep.subr.mxu0 0.0
    %867 = vmatpush1.xpose.msra.mxu0 0.0
    %868 = vmatprep.subr.mxu0 0.0
    %869 = vmatpush1.xpose.msra.mxu0 0.0
    %870 = vmatprep.subr.mxu0 0.0
    %871 = vmatpush1.xpose.msra.mxu0 0.0
    %872 = vmatprep.subr.mxu0 0.0
    %873 = vmatpush1.xpose.msra.mxu0 0.0
    %874 = vmatprep.subr.mxu0 0.0
    %875 = vmatpush1.xpose.msra.mxu0 0.0
    %876 = vmatprep.subr.mxu0 0.0
    %877 = vmatpush1.xpose.msra.mxu0 0.0
    %878 = vmatprep.subr.mxu0 0.0
    %879 = vmatpush1.xpose.msra.mxu0 0.0
    %880 = vmatprep.subr.mxu0 0.0
    %881 = vmatpush1.xpose.msra.mxu0 0.0
    %882 = vmatprep.subr.mxu0 0.0
    %883 = vmatpush1.xpose.msra.mxu0 0.0
    %884 = vmatprep.subr.mxu0 0.0
    %885 = vmatpush1.xpose.msra.mxu0 0.0
    %886 = vmatprep.subr.mxu0 0.0
    %887 = vmatpush1.xpose.msra.mxu0 0.0
    %888 = vmatprep.subr.mxu0 0.0
    %889 = vmatpush1.xpose.msra.mxu0 0.0
    %890 = vmatprep.subr.mxu0 0.0
    %891 = vmatpush1.xpose.msra.mxu0 0.0
    %892 = vmatprep.subr.mxu0 0.0
    %893 = vmatpush1.xpose.msra.mxu0 %v860
    %894 = vmatprep.subr.mxu0 0.0
    %895 = vmatpush2.xpose.msra.mxu0 0.0
    %896 = vmatprep.subr.mxu0 0.0
    %897 = vmatpush2.xpose.msra.mxu0 0.0
    %898 = vmatprep.subr.mxu0 0.0
    %899 = vmatpush2.xpose.msra.mxu0 0.0
    %900 = vmatprep.subr.mxu0 0.0
    %901 = vmatpush2.xpose.msra.mxu0 0.0
    %902 = vmatprep.subr.mxu0 0.0
    %903 = vmatpush2.xpose.msra.mxu0 0.0
    %904 = vmatprep.subr.mxu0 0.0
    %905 = vmatpush2.xpose.msra.mxu0 0.0
    %906 = vmatprep.subr.mxu0 0.0
    %907 = vmatpush2.xpose.msra.mxu0 0.0
    %908 = vmatprep.subr.mxu0 0.0
    %909 = vmatpush2.xpose.msra.mxu0 0.0
    %910 = vmatprep.subr.mxu0 0.0
    %911 = vmatpush2.xpose.msra.mxu0 0.0
    %912 = vmatprep.subr.mxu0 0.0
    %913 = vmatpush2.xpose.msra.mxu0 0.0
    %914 = vmatprep.subr.mxu0 0.0
    %915 = vmatpush2.xpose.msra.mxu0 0.0
    %916 = vmatprep.subr.mxu0 0.0
    %917 = vmatpush2.xpose.msra.mxu0 0.0
    %918 = vmatprep.subr.mxu0 0.0
    %919 = vmatpush2.xpose.msra.mxu0 0.0
    %920 = vmatprep.subr.mxu0 0.0
    %921 = vmatpush2.xpose.msra.mxu0 0.0
    %922 = vmatprep.subr.mxu0 0.0
    %923 = vmatpush2.xpose.msra.mxu0 0.0
    %924 = vmatprep.subr.mxu0 0.0
    %925 = vmatpush2.xpose.msra.mxu0 0.0
    %926 = vmatprep.mubr.f32.mxu0 0.0
    %927 = vmatmul.mubr.f32.gmra.mxu0 %v858
    %v928 = vpop.f32.mrf.mxu0
    %v929 = vadd.f32 0.0, %v928
    %v930 = vpop.f32.mrf.mxu0
    %931 = vdwg.mxu0
    %932 = vrot.lane.b32.xlu0 %v127, 112
    %v933 = vpop.permute.xlu0 %932
    %934 = vrot.lane.b32.xlu0 %v127, 80
    %v935 = vpop.permute.xlu0 %934
    %v936 = vsel %vm133, %v933, 0
    %v938 = vsel %vm133, %v935, 0
    %940 = vmatprep.subr.mxu0 0.0
    %941 = vmatpush1.xpose.msra.mxu0 0.0
    %942 = vmatprep.subr.mxu0 0.0
    %943 = vmatpush1.xpose.msra.mxu0 0.0
    %944 = vmatprep.subr.mxu0 0.0
    %945 = vmatpush1.xpose.msra.mxu0 0.0
    %946 = vmatprep.subr.mxu0 0.0
    %947 = vmatpush1.xpose.msra.mxu0 0.0
    %948 = vmatprep.subr.mxu0 0.0
    %949 = vmatpush1.xpose.msra.mxu0 0.0
    %950 = vmatprep.subr.mxu0 0.0
    %951 = vmatpush1.xpose.msra.mxu0 0.0
    %952 = vmatprep.subr.mxu0 0.0
    %953 = vmatpush1.xpose.msra.mxu0 0.0
    %954 = vmatprep.subr.mxu0 0.0
    %955 = vmatpush1.xpose.msra.mxu0 0.0
    %956 = vmatprep.subr.mxu0 0.0
    %957 = vmatpush1.xpose.msra.mxu0 0.0
    %958 = vmatprep.subr.mxu0 0.0
    %959 = vmatpush1.xpose.msra.mxu0 0.0
    %960 = vmatprep.subr.mxu0 0.0
    %961 = vmatpush1.xpose.msra.mxu0 0.0
    %962 = vmatprep.subr.mxu0 0.0
    %963 = vmatpush1.xpose.msra.mxu0 0.0
    %964 = vmatprep.subr.mxu0 0.0
    %965 = vmatpush1.xpose.msra.mxu0 0.0
    %966 = vmatprep.subr.mxu0 0.0
    %967 = vmatpush1.xpose.msra.mxu0 0.0
    %968 = vmatprep.subr.mxu0 0.0
    %969 = vmatpush1.xpose.msra.mxu0 0.0
    %970 = vmatprep.subr.mxu0 0.0
    %971 = vmatpush1.xpose.msra.mxu0 %v938
    %972 = vmatprep.subr.mxu0 0.0
    %973 = vmatpush2.xpose.msra.mxu0 0.0
    %974 = vmatprep.subr.mxu0 0.0
    %975 = vmatpush2.xpose.msra.mxu0 0.0
    %976 = vmatprep.subr.mxu0 0.0
    %977 = vmatpush2.xpose.msra.mxu0 0.0
    %978 = vmatprep.subr.mxu0 0.0
    %979 = vmatpush2.xpose.msra.mxu0 0.0
    %980 = vmatprep.subr.mxu0 0.0
    %981 = vmatpush2.xpose.msra.mxu0 0.0
    %982 = vmatprep.subr.mxu0 0.0
    %983 = vmatpush2.xpose.msra.mxu0 0.0
    %984 = vmatprep.subr.mxu0 0.0
    %985 = vmatpush2.xpose.msra.mxu0 0.0
    %986 = vmatprep.subr.mxu0 0.0
    %987 = vmatpush2.xpose.msra.mxu0 0.0
    %988 = vmatprep.subr.mxu0 0.0
    %989 = vmatpush2.xpose.msra.mxu0 0.0
    %990 = vmatprep.subr.mxu0 0.0
    %991 = vmatpush2.xpose.msra.mxu0 0.0
    %992 = vmatprep.subr.mxu0 0.0
    %993 = vmatpush2.xpose.msra.mxu0 0.0
    %994 = vmatprep.subr.mxu0 0.0
    %995 = vmatpush2.xpose.msra.mxu0 0.0
    %996 = vmatprep.subr.mxu0 0.0
    %997 = vmatpush2.xpose.msra.mxu0 0.0
    %998 = vmatprep.subr.mxu0 0.0
    %999 = vmatpush2.xpose.msra.mxu0 0.0
    %1000 = vmatprep.subr.mxu0 0.0
    %1001 = vmatpush2.xpose.msra.mxu0 0.0
    %1002 = vmatprep.subr.mxu0 0.0
    %1003 = vmatpush2.xpose.msra.mxu0 0.0
    %1004 = vmatprep.mubr.f32.mxu0 0.0
    %1005 = vmatmul.mubr.f32.gmra.mxu0 %v936
    %v1006 = vpop.f32.mrf.mxu0
    %v1007 = vadd.f32 0.0, %v1006
    %v1008 = vpop.f32.mrf.mxu0
    %1009 = vdwg.mxu0
    %v1010 = vsel %vm133, %v929, -inf
    %v1011 = vrot.slane %v1010, 4
    %v1012 = vmax.f32 %v1010, %v1011
    %v1013 = vrot.slane %v1012, 2
    %v1014 = vmax.f32 %v1012, %v1013
    %v1015 = vrot.slane %v1014, 1
    %v1016 = vmax.f32 %v1014, %v1015
    %v1017 = vsel %vm133, %v1007, -inf
    %v1018 = vrot.slane %v1017, 4
    %v1019 = vmax.f32 %v1017, %v1018
    %v1020 = vrot.slane %v1019, 2
    %v1021 = vmax.f32 %v1019, %v1020
    %v1022 = vrot.slane %v1021, 1
    %v1023 = vmax.f32 %v1021, %v1022
    %v1024 = vsub.f32 %v929, %v1016
    %v1025 = vsub.f32 %v1007, %v1023
    %v1026 = vmul.f32 %v1024, 1.442695
    %v1027 = vpow.pop %v1026
    %v1028 = vmul.f32 %v1025, 1.442695
    %v1029 = vpow.pop %v1028
    %v1030 = vsel %vm133, %v1027, 0.0
    %v1031 = vrot.slane %v1030, 4
    %v1032 = vadd.f32 %v1030, %v1031
    %v1033 = vrot.slane %v1032, 2
    %v1034 = vadd.f32 %v1032, %v1033
    %v1035 = vrot.slane %v1034, 1
    %v1036 = vadd.f32 %v1034, %v1035
    %v1037 = vsel %vm133, %v1029, 0.0
    %v1038 = vrot.slane %v1037, 4
    %v1039 = vadd.f32 %v1037, %v1038
    %v1040 = vrot.slane %v1039, 2
    %v1041 = vadd.f32 %v1039, %v1040
    %v1042 = vrot.slane %v1041, 1
    %v1043 = vadd.f32 %v1041, %v1042
    %v1044 = vrcp.pop %v1036
    %v1045 = vrcp.pop %v1043
    %v1046 = vmul.f32 %v1027, %v1044
    %v1047 = vmul.f32 %v1029, %v1045
    %v1048 = vsel %vm133, %v1046, 0.0
    %v1049 = vrot.slane %v1048, 4
    %v1050 = vadd.f32 %v1048, %v1049
    %v1051 = vrot.slane %v1050, 2
    %v1052 = vadd.f32 %v1050, %v1051
    %v1053 = vrot.slane %v1052, 1
    %v1054 = vadd.f32 %v1052, %v1053
    %v1055 = vsel %vm133, %v1047, 0.0
    %v1056 = vrot.slane %v1055, 4
    %v1057 = vadd.f32 %v1055, %v1056
    %v1058 = vrot.slane %v1057, 2
    %v1059 = vadd.f32 %v1057, %v1058
    %v1060 = vrot.slane %v1059, 1
    %v1061 = vadd.f32 %v1059, %v1060
    %v1062 = vmul.f32 %v1054, %v337
    %v1063 = vmul.f32 %v1061, %v337
    %1064 = vrot.lane.b32.xlu0 %v122, 48
    %v1065 = vpop.permute.xlu0 %1064
    %v1068 = vsel %vm133, %v1062, 0
    %1070 = vmatprep.subr.mxu0 0.0
    %1071 = vmatpush1.msra.mxu0 0.0
    %1072 = vmatprep.subr.mxu0 0.0
    %1073 = vmatpush1.msra.mxu0 0.0
    %1074 = vmatprep.subr.mxu0 0.0
    %1075 = vmatpush1.msra.mxu0 0.0
    %1076 = vmatprep.subr.mxu0 0.0
    %1077 = vmatpush1.msra.mxu0 0.0
    %1078 = vmatprep.subr.mxu0 0.0
    %1079 = vmatpush1.msra.mxu0 0.0
    %1080 = vmatprep.subr.mxu0 0.0
    %1081 = vmatpush1.msra.mxu0 0.0
    %1082 = vmatprep.subr.mxu0 0.0
    %1083 = vmatpush1.msra.mxu0 0.0
    %1084 = vmatprep.subr.mxu0 0.0
    %1085 = vmatpush1.msra.mxu0 0.0
    %1086 = vmatprep.subr.mxu0 0.0
    %1087 = vmatpush1.msra.mxu0 0.0
    %1088 = vmatprep.subr.mxu0 0.0
    %1089 = vmatpush1.msra.mxu0 0.0
    %1090 = vmatprep.subr.mxu0 0.0
    %1091 = vmatpush1.msra.mxu0 0.0
    %1092 = vmatprep.subr.mxu0 0.0
    %1093 = vmatpush1.msra.mxu0 0.0
    %1094 = vmatprep.subr.mxu0 0.0
    %1095 = vmatpush1.msra.mxu0 0.0
    %1096 = vmatprep.subr.mxu0 0.0
    %1097 = vmatpush1.msra.mxu0 0.0
    %1098 = vmatprep.subr.mxu0 0.0
    %1099 = vmatpush1.msra.mxu0 0.0
    %1100 = vmatprep.subr.mxu0 0.0
    %1101 = vmatpush1.msra.mxu0 %v1065
    %1102 = vmatprep.subr.mxu0 0.0
    %1103 = vmatpush2.msra.mxu0 0.0
    %1104 = vmatprep.subr.mxu0 0.0
    %1105 = vmatpush2.msra.mxu0 0.0
    %1106 = vmatprep.subr.mxu0 0.0
    %1107 = vmatpush2.msra.mxu0 0.0
    %1108 = vmatprep.subr.mxu0 0.0
    %1109 = vmatpush2.msra.mxu0 0.0
    %1110 = vmatprep.subr.mxu0 0.0
    %1111 = vmatpush2.msra.mxu0 0.0
    %1112 = vmatprep.subr.mxu0 0.0
    %1113 = vmatpush2.msra.mxu0 0.0
    %1114 = vmatprep.subr.mxu0 0.0
    %1115 = vmatpush2.msra.mxu0 0.0
    %1116 = vmatprep.subr.mxu0 0.0
    %1117 = vmatpush2.msra.mxu0 0.0
    %1118 = vmatprep.subr.mxu0 0.0
    %1119 = vmatpush2.msra.mxu0 0.0
    %1120 = vmatprep.subr.mxu0 0.0
    %1121 = vmatpush2.msra.mxu0 0.0
    %1122 = vmatprep.subr.mxu0 0.0
    %1123 = vmatpush2.msra.mxu0 0.0
    %1124 = vmatprep.subr.mxu0 0.0
    %1125 = vmatpush2.msra.mxu0 0.0
    %1126 = vmatprep.subr.mxu0 0.0
    %1127 = vmatpush2.msra.mxu0 0.0
    %1128 = vmatprep.subr.mxu0 0.0
    %1129 = vmatpush2.msra.mxu0 0.0
    %1130 = vmatprep.subr.mxu0 0.0
    %1131 = vmatpush2.msra.mxu0 0.0
    %1132 = vmatprep.subr.mxu0 0.0
    %1133 = vmatpush2.msra.mxu0 0.0
    %1134 = vmatprep.mubr.f32.mxu0 0.0
    %1135 = vmatmul.mubr.f32.gmra.mxu0 %v1068
    %v1136 = vpop.f32.mrf.mxu0
    %v1137 = vadd.f32 0.0, %v1136
    %v1138 = vpop.f32.mrf.mxu0
    %1139 = vdwg.mxu0
    %1140 = vrot.lane.b32.xlu0 %v127, 48
    %v1141 = vpop.permute.xlu0 %1140
    %v1144 = vsel %vm133, %v1063, 0
    %1146 = vmatprep.subr.mxu0 0.0
    %1147 = vmatpush1.msra.mxu0 0.0
    %1148 = vmatprep.subr.mxu0 0.0
    %1149 = vmatpush1.msra.mxu0 0.0
    %1150 = vmatprep.subr.mxu0 0.0
    %1151 = vmatpush1.msra.mxu0 0.0
    %1152 = vmatprep.subr.mxu0 0.0
    %1153 = vmatpush1.msra.mxu0 0.0
    %1154 = vmatprep.subr.mxu0 0.0
    %1155 = vmatpush1.msra.mxu0 0.0
    %1156 = vmatprep.subr.mxu0 0.0
    %1157 = vmatpush1.msra.mxu0 0.0
    %1158 = vmatprep.subr.mxu0 0.0
    %1159 = vmatpush1.msra.mxu0 0.0
    %1160 = vmatprep.subr.mxu0 0.0
    %1161 = vmatpush1.msra.mxu0 0.0
    %1162 = vmatprep.subr.mxu0 0.0
    %1163 = vmatpush1.msra.mxu0 0.0
    %1164 = vmatprep.subr.mxu0 0.0
    %1165 = vmatpush1.msra.mxu0 0.0
    %1166 = vmatprep.subr.mxu0 0.0
    %1167 = vmatpush1.msra.mxu0 0.0
    %1168 = vmatprep.subr.mxu0 0.0
    %1169 = vmatpush1.msra.mxu0 0.0
    %1170 = vmatprep.subr.mxu0 0.0
    %1171 = vmatpush1.msra.mxu0 0.0
    %1172 = vmatprep.subr.mxu0 0.0
    %1173 = vmatpush1.msra.mxu0 0.0
    %1174 = vmatprep.subr.mxu0 0.0
    %1175 = vmatpush1.msra.mxu0 0.0
    %1176 = vmatprep.subr.mxu0 0.0
    %1177 = vmatpush1.msra.mxu0 %v1141
    %1178 = vmatprep.subr.mxu0 0.0
    %1179 = vmatpush2.msra.mxu0 0.0
    %1180 = vmatprep.subr.mxu0 0.0
    %1181 = vmatpush2.msra.mxu0 0.0
    %1182 = vmatprep.subr.mxu0 0.0
    %1183 = vmatpush2.msra.mxu0 0.0
    %1184 = vmatprep.subr.mxu0 0.0
    %1185 = vmatpush2.msra.mxu0 0.0
    %1186 = vmatprep.subr.mxu0 0.0
    %1187 = vmatpush2.msra.mxu0 0.0
    %1188 = vmatprep.subr.mxu0 0.0
    %1189 = vmatpush2.msra.mxu0 0.0
    %1190 = vmatprep.subr.mxu0 0.0
    %1191 = vmatpush2.msra.mxu0 0.0
    %1192 = vmatprep.subr.mxu0 0.0
    %1193 = vmatpush2.msra.mxu0 0.0
    %1194 = vmatprep.subr.mxu0 0.0
    %1195 = vmatpush2.msra.mxu0 0.0
    %1196 = vmatprep.subr.mxu0 0.0
    %1197 = vmatpush2.msra.mxu0 0.0
    %1198 = vmatprep.subr.mxu0 0.0
    %1199 = vmatpush2.msra.mxu0 0.0
    %1200 = vmatprep.subr.mxu0 0.0
    %1201 = vmatpush2.msra.mxu0 0.0
    %1202 = vmatprep.subr.mxu0 0.0
    %1203 = vmatpush2.msra.mxu0 0.0
    %1204 = vmatprep.subr.mxu0 0.0
    %1205 = vmatpush2.msra.mxu0 0.0
    %1206 = vmatprep.subr.mxu0 0.0
    %1207 = vmatpush2.msra.mxu0 0.0
    %1208 = vmatprep.subr.mxu0 0.0
    %1209 = vmatpush2.msra.mxu0 0.0
    %1210 = vmatprep.mubr.f32.mxu0 0.0
    %1211 = vmatmul.mubr.f32.gmra.mxu0 %v1144
    %v1212 = vpop.f32.mrf.mxu0
    %v1213 = vadd.f32 0.0, %v1212
    %v1214 = vpop.f32.mrf.mxu0
    %1215 = vdwg.mxu0
    %1216 = vrot.lane.b32.xlu0 %v122, 104
    %v1217 = vpop.permute.xlu0 %1216
    %1218 = vrot.lane.b32.xlu0 %v122, 72
    %v1219 = vpop.permute.xlu0 %1218
    %v1220 = vsel %vm133, %v1217, 0
    %v1222 = vsel %vm133, %v1219, 0
    %1224 = vmatprep.subr.mxu0 0.0
    %1225 = vmatpush1.xpose.msra.mxu0 0.0
    %1226 = vmatprep.subr.mxu0 0.0
    %1227 = vmatpush1.xpose.msra.mxu0 0.0
    %1228 = vmatprep.subr.mxu0 0.0
    %1229 = vmatpush1.xpose.msra.mxu0 0.0
    %1230 = vmatprep.subr.mxu0 0.0
    %1231 = vmatpush1.xpose.msra.mxu0 0.0
    %1232 = vmatprep.subr.mxu0 0.0
    %1233 = vmatpush1.xpose.msra.mxu0 0.0
    %1234 = vmatprep.subr.mxu0 0.0
    %1235 = vmatpush1.xpose.msra.mxu0 0.0
    %1236 = vmatprep.subr.mxu0 0.0
    %1237 = vmatpush1.xpose.msra.mxu0 0.0
    %1238 = vmatprep.subr.mxu0 0.0
    %1239 = vmatpush1.xpose.msra.mxu0 0.0
    %1240 = vmatprep.subr.mxu0 0.0
    %1241 = vmatpush1.xpose.msra.mxu0 0.0
    %1242 = vmatprep.subr.mxu0 0.0
    %1243 = vmatpush1.xpose.msra.mxu0 0.0
    %1244 = vmatprep.subr.mxu0 0.0
    %1245 = vmatpush1.xpose.msra.mxu0 0.0
    %1246 = vmatprep.subr.mxu0 0.0
    %1247 = vmatpush1.xpose.msra.mxu0 0.0
    %1248 = vmatprep.subr.mxu0 0.0
    %1249 = vmatpush1.xpose.msra.mxu0 0.0
    %1250 = vmatprep.subr.mxu0 0.0
    %1251 = vmatpush1.xpose.msra.mxu0 0.0
    %1252 = vmatprep.subr.mxu0 0.0
    %1253 = vmatpush1.xpose.msra.mxu0 0.0
    %1254 = vmatprep.subr.mxu0 0.0
    %1255 = vmatpush1.xpose.msra.mxu0 %v1222
    %1256 = vmatprep.subr.mxu0 0.0
    %1257 = vmatpush2.xpose.msra.mxu0 0.0
    %1258 = vmatprep.subr.mxu0 0.0
    %1259 = vmatpush2.xpose.msra.mxu0 0.0
    %1260 = vmatprep.subr.mxu0 0.0
    %1261 = vmatpush2.xpose.msra.mxu0 0.0
    %1262 = vmatprep.subr.mxu0 0.0
    %1263 = vmatpush2.xpose.msra.mxu0 0.0
    %1264 = vmatprep.subr.mxu0 0.0
    %1265 = vmatpush2.xpose.msra.mxu0 0.0
    %1266 = vmatprep.subr.mxu0 0.0
    %1267 = vmatpush2.xpose.msra.mxu0 0.0
    %1268 = vmatprep.subr.mxu0 0.0
    %1269 = vmatpush2.xpose.msra.mxu0 0.0
    %1270 = vmatprep.subr.mxu0 0.0
    %1271 = vmatpush2.xpose.msra.mxu0 0.0
    %1272 = vmatprep.subr.mxu0 0.0
    %1273 = vmatpush2.xpose.msra.mxu0 0.0
    %1274 = vmatprep.subr.mxu0 0.0
    %1275 = vmatpush2.xpose.msra.mxu0 0.0
    %1276 = vmatprep.subr.mxu0 0.0
    %1277 = vmatpush2.xpose.msra.mxu0 0.0
    %1278 = vmatprep.subr.mxu0 0.0
    %1279 = vmatpush2.xpose.msra.mxu0 0.0
    %1280 = vmatprep.subr.mxu0 0.0
    %1281 = vmatpush2.xpose.msra.mxu0 0.0
    %1282 = vmatprep.subr.mxu0 0.0
    %1283 = vmatpush2.xpose.msra.mxu0 0.0
    %1284 = vmatprep.subr.mxu0 0.0
    %1285 = vmatpush2.xpose.msra.mxu0 0.0
    %1286 = vmatprep.subr.mxu0 0.0
    %1287 = vmatpush2.xpose.msra.mxu0 0.0
    %1288 = vmatprep.mubr.f32.mxu0 0.0
    %1289 = vmatmul.mubr.f32.gmra.mxu0 %v1220
    %v1290 = vpop.f32.mrf.mxu0
    %v1291 = vadd.f32 0.0, %v1290
    %v1292 = vpop.f32.mrf.mxu0
    %1293 = vdwg.mxu0
    %1294 = vrot.lane.b32.xlu0 %v127, 104
    %v1295 = vpop.permute.xlu0 %1294
    %1296 = vrot.lane.b32.xlu0 %v127, 72
    %v1297 = vpop.permute.xlu0 %1296
    %v1298 = vsel %vm133, %v1295, 0
    %v1300 = vsel %vm133, %v1297, 0
    %1302 = vmatprep.subr.mxu0 0.0
    %1303 = vmatpush1.xpose.msra.mxu0 0.0
    %1304 = vmatprep.subr.mxu0 0.0
    %1305 = vmatpush1.xpose.msra.mxu0 0.0
    %1306 = vmatprep.subr.mxu0 0.0
    %1307 = vmatpush1.xpose.msra.mxu0 0.0
    %1308 = vmatprep.subr.mxu0 0.0
    %1309 = vmatpush1.xpose.msra.mxu0 0.0
    %1310 = vmatprep.subr.mxu0 0.0
    %1311 = vmatpush1.xpose.msra.mxu0 0.0
    %1312 = vmatprep.subr.mxu0 0.0
    %1313 = vmatpush1.xpose.msra.mxu0 0.0
    %1314 = vmatprep.subr.mxu0 0.0
    %1315 = vmatpush1.xpose.msra.mxu0 0.0
    %1316 = vmatprep.subr.mxu0 0.0
    %1317 = vmatpush1.xpose.msra.mxu0 0.0
    %1318 = vmatprep.subr.mxu0 0.0
    %1319 = vmatpush1.xpose.msra.mxu0 0.0
    %1320 = vmatprep.subr.mxu0 0.0
    %1321 = vmatpush1.xpose.msra.mxu0 0.0
    %1322 = vmatprep.subr.mxu0 0.0
    %1323 = vmatpush1.xpose.msra.mxu0 0.0
    %1324 = vmatprep.subr.mxu0 0.0
    %1325 = vmatpush1.xpose.msra.mxu0 0.0
    %1326 = vmatprep.subr.mxu0 0.0
    %1327 = vmatpush1.xpose.msra.mxu0 0.0
    %1328 = vmatprep.subr.mxu0 0.0
    %1329 = vmatpush1.xpose.msra.mxu0 0.0
    %1330 = vmatprep.subr.mxu0 0.0
    %1331 = vmatpush1.xpose.msra.mxu0 0.0
    %1332 = vmatprep.subr.mxu0 0.0
    %1333 = vmatpush1.xpose.msra.mxu0 %v1300
    %1334 = vmatprep.subr.mxu0 0.0
    %1335 = vmatpush2.xpose.msra.mxu0 0.0
    %1336 = vmatprep.subr.mxu0 0.0
    %1337 = vmatpush2.xpose.msra.mxu0 0.0
    %1338 = vmatprep.subr.mxu0 0.0
    %1339 = vmatpush2.xpose.msra.mxu0 0.0
    %1340 = vmatprep.subr.mxu0 0.0
    %1341 = vmatpush2.xpose.msra.mxu0 0.0
    %1342 = vmatprep.subr.mxu0 0.0
    %1343 = vmatpush2.xpose.msra.mxu0 0.0
    %1344 = vmatprep.subr.mxu0 0.0
    %1345 = vmatpush2.xpose.msra.mxu0 0.0
    %1346 = vmatprep.subr.mxu0 0.0
    %1347 = vmatpush2.xpose.msra.mxu0 0.0
    %1348 = vmatprep.subr.mxu0 0.0
    %1349 = vmatpush2.xpose.msra.mxu0 0.0
    %1350 = vmatprep.subr.mxu0 0.0
    %1351 = vmatpush2.xpose.msra.mxu0 0.0
    %1352 = vmatprep.subr.mxu0 0.0
    %1353 = vmatpush2.xpose.msra.mxu0 0.0
    %1354 = vmatprep.subr.mxu0 0.0
    %1355 = vmatpush2.xpose.msra.mxu0 0.0
    %1356 = vmatprep.subr.mxu0 0.0
    %1357 = vmatpush2.xpose.msra.mxu0 0.0
    %1358 = vmatprep.subr.mxu0 0.0
    %1359 = vmatpush2.xpose.msra.mxu0 0.0
    %1360 = vmatprep.subr.mxu0 0.0
    %1361 = vmatpush2.xpose.msra.mxu0 0.0
    %1362 = vmatprep.subr.mxu0 0.0
    %1363 = vmatpush2.xpose.msra.mxu0 0.0
    %1364 = vmatprep.subr.mxu0 0.0
    %1365 = vmatpush2.xpose.msra.mxu0 0.0
    %1366 = vmatprep.mubr.f32.mxu0 0.0
    %1367 = vmatmul.mubr.f32.gmra.mxu0 %v1298
    %v1368 = vpop.f32.mrf.mxu0
    %v1369 = vadd.f32 0.0, %v1368
    %v1370 = vpop.f32.mrf.mxu0
    %1371 = vdwg.mxu0
    %v1372 = vsel %vm133, %v1291, -inf
    %v1373 = vrot.slane %v1372, 4
    %v1374 = vmax.f32 %v1372, %v1373
    %v1375 = vrot.slane %v1374, 2
    %v1376 = vmax.f32 %v1374, %v1375
    %v1377 = vrot.slane %v1376, 1
    %v1378 = vmax.f32 %v1376, %v1377
    %v1379 = vsel %vm133, %v1369, -inf
    %v1380 = vrot.slane %v1379, 4
    %v1381 = vmax.f32 %v1379, %v1380
    %v1382 = vrot.slane %v1381, 2
    %v1383 = vmax.f32 %v1381, %v1382
    %v1384 = vrot.slane %v1383, 1
    %v1385 = vmax.f32 %v1383, %v1384
    %v1386 = vsub.f32 %v1291, %v1378
    %v1387 = vsub.f32 %v1369, %v1385
    %v1388 = vmul.f32 %v1386, 1.442695
    %v1389 = vpow.pop %v1388
    %v1390 = vmul.f32 %v1387, 1.442695
    %v1391 = vpow.pop %v1390
    %v1392 = vsel %vm133, %v1389, 0.0
    %v1393 = vrot.slane %v1392, 4
    %v1394 = vadd.f32 %v1392, %v1393
    %v1395 = vrot.slane %v1394, 2
    %v1396 = vadd.f32 %v1394, %v1395
    %v1397 = vrot.slane %v1396, 1
    %v1398 = vadd.f32 %v1396, %v1397
    %v1399 = vsel %vm133, %v1391, 0.0
    %v1400 = vrot.slane %v1399, 4
    %v1401 = vadd.f32 %v1399, %v1400
    %v1402 = vrot.slane %v1401, 2
    %v1403 = vadd.f32 %v1401, %v1402
    %v1404 = vrot.slane %v1403, 1
    %v1405 = vadd.f32 %v1403, %v1404
    %v1406 = vrcp.pop %v1398
    %v1407 = vrcp.pop %v1405
    %v1408 = vmul.f32 %v1389, %v1406
    %v1409 = vmul.f32 %v1391, %v1407
    %v1410 = vsel %vm133, %v1408, 0.0
    %v1411 = vrot.slane %v1410, 4
    %v1412 = vadd.f32 %v1410, %v1411
    %v1413 = vrot.slane %v1412, 2
    %v1414 = vadd.f32 %v1412, %v1413
    %v1415 = vrot.slane %v1414, 1
    %v1416 = vadd.f32 %v1414, %v1415
    %v1417 = vsel %vm133, %v1409, 0.0
    %v1418 = vrot.slane %v1417, 4
    %v1419 = vadd.f32 %v1417, %v1418
    %v1420 = vrot.slane %v1419, 2
    %v1421 = vadd.f32 %v1419, %v1420
    %v1422 = vrot.slane %v1421, 1
    %v1423 = vadd.f32 %v1421, %v1422
    %v1424 = vmul.f32 %v1416, %v337
    %v1425 = vmul.f32 %v1423, %v337
    %1426 = vrot.lane.b32.xlu0 %v122, 40
    %v1427 = vpop.permute.xlu0 %1426
    %v1430 = vsel %vm133, %v1424, 0
    %1432 = vmatprep.subr.mxu0 0.0
    %1433 = vmatpush1.msra.mxu0 0.0
    %1434 = vmatprep.subr.mxu0 0.0
    %1435 = vmatpush1.msra.mxu0 0.0
    %1436 = vmatprep.subr.mxu0 0.0
    %1437 = vmatpush1.msra.mxu0 0.0
    %1438 = vmatprep.subr.mxu0 0.0
    %1439 = vmatpush1.msra.mxu0 0.0
    %1440 = vmatprep.subr.mxu0 0.0
    %1441 = vmatpush1.msra.mxu0 0.0
    %1442 = vmatprep.subr.mxu0 0.0
    %1443 = vmatpush1.msra.mxu0 0.0
    %1444 = vmatprep.subr.mxu0 0.0
    %1445 = vmatpush1.msra.mxu0 0.0
    %1446 = vmatprep.subr.mxu0 0.0
    %1447 = vmatpush1.msra.mxu0 0.0
    %1448 = vmatprep.subr.mxu0 0.0
    %1449 = vmatpush1.msra.mxu0 0.0
    %1450 = vmatprep.subr.mxu0 0.0
    %1451 = vmatpush1.msra.mxu0 0.0
    %1452 = vmatprep.subr.mxu0 0.0
    %1453 = vmatpush1.msra.mxu0 0.0
    %1454 = vmatprep.subr.mxu0 0.0
    %1455 = vmatpush1.msra.mxu0 0.0
    %1456 = vmatprep.subr.mxu0 0.0
    %1457 = vmatpush1.msra.mxu0 0.0
    %1458 = vmatprep.subr.mxu0 0.0
    %1459 = vmatpush1.msra.mxu0 0.0
    %1460 = vmatprep.subr.mxu0 0.0
    %1461 = vmatpush1.msra.mxu0 0.0
    %1462 = vmatprep.subr.mxu0 0.0
    %1463 = vmatpush1.msra.mxu0 %v1427
    %1464 = vmatprep.subr.mxu0 0.0
    %1465 = vmatpush2.msra.mxu0 0.0
    %1466 = vmatprep.subr.mxu0 0.0
    %1467 = vmatpush2.msra.mxu0 0.0
    %1468 = vmatprep.subr.mxu0 0.0
    %1469 = vmatpush2.msra.mxu0 0.0
    %1470 = vmatprep.subr.mxu0 0.0
    %1471 = vmatpush2.msra.mxu0 0.0
    %1472 = vmatprep.subr.mxu0 0.0
    %1473 = vmatpush2.msra.mxu0 0.0
    %1474 = vmatprep.subr.mxu0 0.0
    %1475 = vmatpush2.msra.mxu0 0.0
    %1476 = vmatprep.subr.mxu0 0.0
    %1477 = vmatpush2.msra.mxu0 0.0
    %1478 = vmatprep.subr.mxu0 0.0
    %1479 = vmatpush2.msra.mxu0 0.0
    %1480 = vmatprep.subr.mxu0 0.0
    %1481 = vmatpush2.msra.mxu0 0.0
    %1482 = vmatprep.subr.mxu0 0.0
    %1483 = vmatpush2.msra.mxu0 0.0
    %1484 = vmatprep.subr.mxu0 0.0
    %1485 = vmatpush2.msra.mxu0 0.0
    %1486 = vmatprep.subr.mxu0 0.0
    %1487 = vmatpush2.msra.mxu0 0.0
    %1488 = vmatprep.subr.mxu0 0.0
    %1489 = vmatpush2.msra.mxu0 0.0
    %1490 = vmatprep.subr.mxu0 0.0
    %1491 = vmatpush2.msra.mxu0 0.0
    %1492 = vmatprep.subr.mxu0 0.0
    %1493 = vmatpush2.msra.mxu0 0.0
    %1494 = vmatprep.subr.mxu0 0.0
    %1495 = vmatpush2.msra.mxu0 0.0
    %1496 = vmatprep.mubr.f32.mxu0 0.0
    %1497 = vmatmul.mubr.f32.gmra.mxu0 %v1430
    %v1498 = vpop.f32.mrf.mxu0
    %v1499 = vadd.f32 0.0, %v1498
    %v1500 = vpop.f32.mrf.mxu0
    %1501 = vdwg.mxu0
    %1502 = vrot.lane.b32.xlu0 %v127, 40
    %v1503 = vpop.permute.xlu0 %1502
    %v1506 = vsel %vm133, %v1425, 0
    %1508 = vmatprep.subr.mxu0 0.0
    %1509 = vmatpush1.msra.mxu0 0.0
    %1510 = vmatprep.subr.mxu0 0.0
    %1511 = vmatpush1.msra.mxu0 0.0
    %1512 = vmatprep.subr.mxu0 0.0
    %1513 = vmatpush1.msra.mxu0 0.0
    %1514 = vmatprep.subr.mxu0 0.0
    %1515 = vmatpush1.msra.mxu0 0.0
    %1516 = vmatprep.subr.mxu0 0.0
    %1517 = vmatpush1.msra.mxu0 0.0
    %1518 = vmatprep.subr.mxu0 0.0
    %1519 = vmatpush1.msra.mxu0 0.0
    %1520 = vmatprep.subr.mxu0 0.0
    %1521 = vmatpush1.msra.mxu0 0.0
    %1522 = vmatprep.subr.mxu0 0.0
    %1523 = vmatpush1.msra.mxu0 0.0
    %1524 = vmatprep.subr.mxu0 0.0
    %1525 = vmatpush1.msra.mxu0 0.0
    %1526 = vmatprep.subr.mxu0 0.0
    %1527 = vmatpush1.msra.mxu0 0.0
    %1528 = vmatprep.subr.mxu0 0.0
    %1529 = vmatpush1.msra.mxu0 0.0
    %1530 = vmatprep.subr.mxu0 0.0
    %1531 = vmatpush1.msra.mxu0 0.0
    %1532 = vmatprep.subr.mxu0 0.0
    %1533 = vmatpush1.msra.mxu0 0.0
    %1534 = vmatprep.subr.mxu0 0.0
    %1535 = vmatpush1.msra.mxu0 0.0
    %1536 = vmatprep.subr.mxu0 0.0
    %1537 = vmatpush1.msra.mxu0 0.0
    %1538 = vmatprep.subr.mxu0 0.0
    %1539 = vmatpush1.msra.mxu0 %v1503
    %1540 = vmatprep.subr.mxu0 0.0
    %1541 = vmatpush2.msra.mxu0 0.0
    %1542 = vmatprep.subr.mxu0 0.0
    %1543 = vmatpush2.msra.mxu0 0.0
    %1544 = vmatprep.subr.mxu0 0.0
    %1545 = vmatpush2.msra.mxu0 0.0
    %1546 = vmatprep.subr.mxu0 0.0
    %1547 = vmatpush2.msra.mxu0 0.0
    %1548 = vmatprep.subr.mxu0 0.0
    %1549 = vmatpush2.msra.mxu0 0.0
    %1550 = vmatprep.subr.mxu0 0.0
    %1551 = vmatpush2.msra.mxu0 0.0
    %1552 = vmatprep.subr.mxu0 0.0
    %1553 = vmatpush2.msra.mxu0 0.0
    %1554 = vmatprep.subr.mxu0 0.0
    %1555 = vmatpush2.msra.mxu0 0.0
    %1556 = vmatprep.subr.mxu0 0.0
    %1557 = vmatpush2.msra.mxu0 0.0
    %1558 = vmatprep.subr.mxu0 0.0
    %1559 = vmatpush2.msra.mxu0 0.0
    %1560 = vmatprep.subr.mxu0 0.0
    %1561 = vmatpush2.msra.mxu0 0.0
    %1562 = vmatprep.subr.mxu0 0.0
    %1563 = vmatpush2.msra.mxu0 0.0
    %1564 = vmatprep.subr.mxu0 0.0
    %1565 = vmatpush2.msra.mxu0 0.0
    %1566 = vmatprep.subr.mxu0 0.0
    %1567 = vmatpush2.msra.mxu0 0.0
    %1568 = vmatprep.subr.mxu0 0.0
    %1569 = vmatpush2.msra.mxu0 0.0
    %1570 = vmatprep.subr.mxu0 0.0
    %1571 = vmatpush2.msra.mxu0 0.0
    %1572 = vmatprep.mubr.f32.mxu0 0.0
    %1573 = vmatmul.mubr.f32.gmra.mxu0 %v1506
    %v1574 = vpop.f32.mrf.mxu0
    %v1575 = vadd.f32 0.0, %v1574
    %v1576 = vpop.f32.mrf.mxu0
    %1577 = vdwg.mxu0
    %1580 = vrot.lane.b32.xlu0 %v775, 8
    %v1581 = vpop.permute.xlu0 %1580
    %1582 = vrot.lane.b32.xlu0 %v851, 8
    %v1583 = vpop.permute.xlu0 %1582
    %1588 = vrot.lane.b32.xlu0 %v1137, 16
    %v1589 = vpop.permute.xlu0 %1588
    %1590 = vrot.lane.b32.xlu0 %v1213, 16
    %v1591 = vpop.permute.xlu0 %1590
    %1596 = vrot.lane.b32.xlu0 %v1499, 24
    %v1597 = vpop.permute.xlu0 %1596
    %1598 = vrot.lane.b32.xlu0 %v1575, 24
    %v1599 = vpop.permute.xlu0 %1598
    %v1602 = vsel %vm133, %v413, %v1581
    %v1603 = vsel %vm133, %v489, %v1583
    %vm1604 = vcmask 130048
    %v1605 = vsel %vm1604, %v1602, %v1589
    %v1606 = vsel %vm1604, %v1603, %v1591
    %vm1607 = vcmask 195584
    %v1608 = vsel %vm1607, %v1605, %v1597
    %v1609 = vsel %vm1607, %v1606, %v1599
    %v1612 = vrot.slane %v1609, 7
    %vm1613 = vcmask 1041409
    %v1614 = vsel %vm1613, %v1612, %v1608
    %1619 = vrot.lane.b32.xlu0 %v35, 32
    %v1620 = vpop.permute.xlu0 %1619
    %1621 = vrot.lane.b32.xlu0 %v36, 32
    %v1622 = vpop.permute.xlu0 %1621
    %1623 = vrot.lane.b32.xlu0 %v37, 32
    %v1624 = vpop.permute.xlu0 %1623
    %1625 = vrot.lane.b32.xlu0 %v38, 32
    %v1626 = vpop.permute.xlu0 %1625
    %1631 = vrot.lane.b32.xlu0 %v46, 32
    %v1632 = vpop.permute.xlu0 %1631
    %v1634 = vsel %vm48, %v1614, 0
    %1636 = vmatprep.subr.mxu0 0.0
    %1637 = vmatpush1.msra.mxu0 0.0
    %1638 = vmatprep.subr.mxu0 0.0
    %1639 = vmatpush1.msra.mxu0 0.0
    %1640 = vmatprep.subr.mxu0 0.0
    %1641 = vmatpush1.msra.mxu0 0.0
    %1642 = vmatprep.subr.mxu0 0.0
    %1643 = vmatpush1.msra.mxu0 0.0
    %1644 = vmatprep.subr.mxu0 0.0
    %1645 = vmatpush1.msra.mxu0 0.0
    %1646 = vmatprep.subr.mxu0 0.0
    %1647 = vmatpush1.msra.mxu0 0.0
    %1648 = vmatprep.subr.mxu0 0.0
    %1649 = vmatpush1.msra.mxu0 0.0
    %1650 = vmatprep.subr.mxu0 0.0
    %1651 = vmatpush1.msra.mxu0 0.0
    %1652 = vmatprep.subr.mxu0 0.0
    %1653 = vmatpush1.msra.mxu0 0.0
    %1654 = vmatprep.subr.mxu0 0.0
    %1655 = vmatpush1.msra.mxu0 0.0
    %1656 = vmatprep.subr.mxu0 0.0
    %1657 = vmatpush1.msra.mxu0 0.0
    %1658 = vmatprep.subr.mxu0 0.0
    %1659 = vmatpush1.msra.mxu0 0.0
    %1660 = vmatprep.subr.mxu0 0.0
    %1661 = vmatpush1.msra.mxu0 %v1626
    %1662 = vmatprep.subr.mxu0 0.0
    %1663 = vmatpush1.msra.mxu0 %v1624
    %1664 = vmatprep.subr.mxu0 0.0
    %1665 = vmatpush1.msra.mxu0 %v1622
    %1666 = vmatprep.subr.mxu0 0.0
    %1667 = vmatpush1.msra.mxu0 %v1620
    %1668 = vmatprep.subr.mxu0 0.0
    %1669 = vmatpush2.msra.mxu0 0.0
    %1670 = vmatprep.subr.mxu0 0.0
    %1671 = vmatpush2.msra.mxu0 0.0
    %1672 = vmatprep.subr.mxu0 0.0
    %1673 = vmatpush2.msra.mxu0 0.0
    %1674 = vmatprep.subr.mxu0 0.0
    %1675 = vmatpush2.msra.mxu0 0.0
    %1676 = vmatprep.subr.mxu0 0.0
    %1677 = vmatpush2.msra.mxu0 0.0
    %1678 = vmatprep.subr.mxu0 0.0
    %1679 = vmatpush2.msra.mxu0 0.0
    %1680 = vmatprep.subr.mxu0 0.0
    %1681 = vmatpush2.msra.mxu0 0.0
    %1682 = vmatprep.subr.mxu0 0.0
    %1683 = vmatpush2.msra.mxu0 0.0
    %1684 = vmatprep.subr.mxu0 0.0
    %1685 = vmatpush2.msra.mxu0 0.0
    %1686 = vmatprep.subr.mxu0 0.0
    %1687 = vmatpush2.msra.mxu0 0.0
    %1688 = vmatprep.subr.mxu0 0.0
    %1689 = vmatpush2.msra.mxu0 0.0
    %1690 = vmatprep.subr.mxu0 0.0
    %1691 = vmatpush2.msra.mxu0 0.0
    %1692 = vmatprep.subr.mxu0 0.0
    %1693 = vmatpush2.msra.mxu0 0.0
    %1694 = vmatprep.subr.mxu0 0.0
    %1695 = vmatpush2.msra.mxu0 0.0
    %1696 = vmatprep.subr.mxu0 0.0
    %1697 = vmatpush2.msra.mxu0 0.0
    %1698 = vmatprep.subr.mxu0 0.0
    %1699 = vmatpush2.msra.mxu0 0.0
    %1700 = vmatprep.mubr.f32.mxu0 0.0
    %1701 = vmatmul.mubr.f32.gmra.mxu0 %v1634
    %v1702 = vpop.f32.mrf.mxu0
    %v1703 = vadd.f32 %v1632, %v1702
    %v1704 = vpop.f32.mrf.mxu0
    %1705 = vdwg.mxu0
    %v1706 = vmax.f32 %v1703, 0.0
    %v1707 = vld [vmem:[%s3] sm:$0xff]
    %v1708 = vld [vmem:[%s3 + $0x8] sm:$0xff]
    %v1709 = vld [vmem:[%s3 + $0x10] sm:$0xff]
    %v1710 = vld [vmem:[%s3 + $0x18] sm:$0xff]
    %v1711 = vld [vmem:[%s4] sm:$0x1]
    %v1713 = vlaneseq
    %v1714 = vshrl.u32 %v1713, 7
    %v1715 = vsub.s32 0, %v1714
    %v1716 = vrot.slane %v1711, %v1715
    %v1719 = vsel %vm48, %v1706, 0
    %1721 = vmatprep.subr.mxu0 0.0
    %1722 = vmatpush1.msra.mxu0 0.0
    %1723 = vmatprep.subr.mxu0 0.0
    %1724 = vmatpush1.msra.mxu0 0.0
    %1725 = vmatprep.subr.mxu0 0.0
    %1726 = vmatpush1.msra.mxu0 0.0
    %1727 = vmatprep.subr.mxu0 0.0
    %1728 = vmatpush1.msra.mxu0 0.0
    %1729 = vmatprep.subr.mxu0 0.0
    %1730 = vmatpush1.msra.mxu0 0.0
    %1731 = vmatprep.subr.mxu0 0.0
    %1732 = vmatpush1.msra.mxu0 0.0
    %1733 = vmatprep.subr.mxu0 0.0
    %1734 = vmatpush1.msra.mxu0 0.0
    %1735 = vmatprep.subr.mxu0 0.0
    %1736 = vmatpush1.msra.mxu0 0.0
    %1737 = vmatprep.subr.mxu0 0.0
    %1738 = vmatpush1.msra.mxu0 0.0
    %1739 = vmatprep.subr.mxu0 0.0
    %1740 = vmatpush1.msra.mxu0 0.0
    %1741 = vmatprep.subr.mxu0 0.0
    %1742 = vmatpush1.msra.mxu0 0.0
    %1743 = vmatprep.subr.mxu0 0.0
    %1744 = vmatpush1.msra.mxu0 0.0
    %1745 = vmatprep.subr.mxu0 0.0
    %1746 = vmatpush1.msra.mxu0 %v1710
    %1747 = vmatprep.subr.mxu0 0.0
    %1748 = vmatpush1.msra.mxu0 %v1709
    %1749 = vmatprep.subr.mxu0 0.0
    %1750 = vmatpush1.msra.mxu0 %v1708
    %1751 = vmatprep.subr.mxu0 0.0
    %1752 = vmatpush1.msra.mxu0 %v1707
    %1753 = vmatprep.subr.mxu0 0.0
    %1754 = vmatpush2.msra.mxu0 0.0
    %1755 = vmatprep.subr.mxu0 0.0
    %1756 = vmatpush2.msra.mxu0 0.0
    %1757 = vmatprep.subr.mxu0 0.0
    %1758 = vmatpush2.msra.mxu0 0.0
    %1759 = vmatprep.subr.mxu0 0.0
    %1760 = vmatpush2.msra.mxu0 0.0
    %1761 = vmatprep.subr.mxu0 0.0
    %1762 = vmatpush2.msra.mxu0 0.0
    %1763 = vmatprep.subr.mxu0 0.0
    %1764 = vmatpush2.msra.mxu0 0.0
    %1765 = vmatprep.subr.mxu0 0.0
    %1766 = vmatpush2.msra.mxu0 0.0
    %1767 = vmatprep.subr.mxu0 0.0
    %1768 = vmatpush2.msra.mxu0 0.0
    %1769 = vmatprep.subr.mxu0 0.0
    %1770 = vmatpush2.msra.mxu0 0.0
    %1771 = vmatprep.subr.mxu0 0.0
    %1772 = vmatpush2.msra.mxu0 0.0
    %1773 = vmatprep.subr.mxu0 0.0
    %1774 = vmatpush2.msra.mxu0 0.0
    %1775 = vmatprep.subr.mxu0 0.0
    %1776 = vmatpush2.msra.mxu0 0.0
    %1777 = vmatprep.subr.mxu0 0.0
    %1778 = vmatpush2.msra.mxu0 0.0
    %1779 = vmatprep.subr.mxu0 0.0
    %1780 = vmatpush2.msra.mxu0 0.0
    %1781 = vmatprep.subr.mxu0 0.0
    %1782 = vmatpush2.msra.mxu0 0.0
    %1783 = vmatprep.subr.mxu0 0.0
    %1784 = vmatpush2.msra.mxu0 0.0
    %1785 = vmatprep.mubr.f32.mxu0 0.0
    %1786 = vmatmul.mubr.f32.gmra.mxu0 %v1719
    %v1787 = vpop.f32.mrf.mxu0
    %v1788 = vadd.f32 %v1716, %v1787
    %v1789 = vpop.f32.mrf.mxu0
    %1790 = vdwg.mxu0
    %vm1791 = vcmask 58368
    %1792 = vst.msk [vmem:[#allocation5] sm:$0x3] %vm1791, %v1788
    // Predicated region
    $region26: #{tpu_custom_call.1} parent=1 // pred_check
      _
    $region27: #{tpu_custom_call.1} parent=1 // pred_check_branch
      %1794 = sbr.rel (0) target = $region29
    $region28: #{tpu_custom_call.1} parent=1 // pred_region
      %s1796 = ssub.s32 32, 32
      %1797 = vsyncadd [#allocation4], %s1796
      %s1799 = sshll.u32 [#allocation5], 4
      %s1800 = int_to_ptr.vmem [resolvable:$true] %s1799
      %1802 = dma.vmem_to_hbm [thread:$0]  %s1800, 32, %s5, [#allocation4]
    $region29: #{tpu_custom_call.1} parent=1 // pred_fallthru
      _
    // Predicated region
    $region30: #{tpu_custom_call.1} parent=1 // pred_check
      _
    $region31: #{tpu_custom_call.1} parent=1 // pred_check_branch
      %1804 = sbr.rel (0) target = $region33
    $region32: #{tpu_custom_call.1} parent=1 // pred_region
      %1805 = dma.done [#allocation4], 32
    $region33: #{tpu_custom_call.1} parent=1 // pred_fallthru
      _
    %1806 = vsyncpa [#allocation3], 1
    %1807 = vsyncpa [#allocation4], 1

</llo_original>
